<compile_context>
chip_gen: v6e
topology: v6e:2x2x1
jax: 0.10.0
libtpu: 0.0.40
codegen_flags: <defaults>
</compile_context>

<pallas_src>
import functools
import math

import jax
import jax.numpy as jnp
from jax import lax
from jax.experimental import pallas as pl
from jax.experimental.pallas import tpu as pltpu

LN_EPS = 1e-5  # PyTorch nn.LayerNorm default eps


# ----------------------------- kernel helpers -----------------------------

def _layernorm(x, gamma, beta):
    mu = jnp.mean(x, axis=-1, keepdims=True)
    var = jnp.mean((x - mu) ** 2, axis=-1, keepdims=True)
    return (x - mu) * lax.rsqrt(var + LN_EPS) * gamma + beta


def _zero_index(*_, n):
    return (0,) * n


# --------------------------- fused forward kernel ---------------------------

def _fused_transformer_kernel(
        x_ref,
        g0_ref, b0_ref, wqkv_ref, bqkv_ref, wo_ref, bo_ref,
        g1_ref, b1_ref, wg_ref, bg_ref, w2_ref, b2_ref,
        gh_ref, bh_ref, wh_ref, bhead_ref,
        o_ref,
        *, n_layers, n_heads, batch, n_tokens, d_hidden):
    N, D = x_ref.shape                       # N = batch * n_tokens
    dh = D // n_heads
    mm = functools.partial(jnp.dot, preferred_element_type=jnp.float32)

    x = x_ref[...]                           # (N, D) f32 residual stream

    for l in range(n_layers):                # static unroll over layers
        # ---------------- attention block (pre-norm) ----------------
        # Layer 0 has no norm0 (pre_normalization=True convention).
        xr = _layernorm(x, g0_ref[l], b0_ref[l]) if l > 0 else x

        # Fused Q|K|V projection (1/sqrt(dh) already folded into W_q, b_q).
        qkv = mm(xr.astype(wqkv_ref.dtype), wqkv_ref[l]) + bqkv_ref[l]  # (N, 3D)

        # Per-(batch, head) attention on static 2-D slices of qkv.
        ctx_rows = []
        for b in range(batch):
            r0 = b * n_tokens
            head_ctx = []
            for h in range(n_heads):
                c0 = h * dh
                q = qkv[r0:r0 + n_tokens, c0:c0 + dh].astype(jnp.bfloat16)
                k = qkv[r0:r0 + n_tokens,
                        D + c0:D + c0 + dh].astype(jnp.bfloat16)
                v = qkv[r0:r0 + n_tokens,
                        2 * D + c0:2 * D + c0 + dh].astype(jnp.bfloat16)
                # scores: contract last dim of q and k (no explicit transpose)
                s = lax.dot_general(q, k, (((1,), (1,)), ((), ())),
                                    preferred_element_type=jnp.float32)  # (T,T)
                s = s - jnp.max(s, axis=-1, keepdims=True)
                p = jnp.exp(s)
                attn = p * pl.reciprocal(
                    jnp.sum(p, axis=-1, keepdims=True), approx=True)
                # TODO(synk): attention dropout omitted (eval-mode identity).
                head_ctx.append(mm(attn.astype(jnp.bfloat16), v))        # (T,dh)
            ctx_rows.append(jnp.concatenate(head_ctx, axis=-1))          # (T, D)
        ctx = jnp.concatenate(ctx_rows, axis=0)                          # (N, D)

        x = x + mm(ctx.astype(wo_ref.dtype), wo_ref[l]) + bo_ref[l]

        # ---------------- feed-forward (GateBlock) block ----------------
        xr = _layernorm(x, g1_ref[l], b1_ref[l])
        g = mm(xr.astype(wg_ref.dtype), wg_ref[l]) + bg_ref[l]  # (N, 2*d_hidden)
        a = g[:, :d_hidden]
        bgate = g[:, d_hidden:]
        h_act = a * jnp.maximum(bgate, 0.0)                     # a * ReLU(b)
        # TODO(synk): ffn / residual dropout omitted (eval-mode identity).
        x = x + mm(h_act.astype(w2_ref.dtype), w2_ref[l]) + b2_ref[l]

    # -------------- last LayerNorm + ReLU + head (lane-padded) --------------
    xr = jnp.maximum(_layernorm(x, gh_ref[...], bh_ref[...]), 0.0)
    o_ref[...] = (mm(xr.astype(wh_ref.dtype), wh_ref[...])
                  + bhead_ref[...]).astype(o_ref.dtype)


# ------------------------------ pallas wrapper ------------------------------

def transformer_forward(x, fused, *, n_layers, n_heads, d_hidden, out_dim):
    B, T, D = x.shape
    N = B * T
    out_pad = fused["wh"].shape[1]
    x2 = x.reshape(N, D)

    kern = functools.partial(
        _fused_transformer_kernel,
        n_layers=n_layers, n_heads=n_heads,
        batch=B, n_tokens=T, d_hidden=d_hidden)

    inputs = (x2,
              fused["g0"], fused["b0"], fused["wqkv"], fused["bqkv"],
              fused["wo"], fused["bo"], fused["g1"], fused["b1"],
              fused["wg"], fused["bg"], fused["w2"], fused["b2"],
              fused["gh"], fused["bh"], fused["wh"], fused["bhead"])

    in_specs = [pl.BlockSpec(a.shape, functools.partial(_zero_index, n=a.ndim))
                for a in inputs]

    y = pl.pallas_call(
        kern,
        out_shape=jax.ShapeDtypeStruct((N, out_pad), jnp.float32),
        grid=(1,),
        in_specs=in_specs,
        out_specs=pl.BlockSpec((N, out_pad), lambda i: (0, 0)),
        compiler_params=pltpu.CompilerParams(
            dimension_semantics=("arbitrary",)),
    )(*inputs)

    return y.reshape(B, T, out_pad)[:, :, :out_dim]


# ------------------------------ parameter init ------------------------------

def init_params(key, *, D, d_hidden, n_layers, out_dim):
    """Per-layer params mirroring the PyTorch module (W stored (in, out))."""
    def dense(k, fan_in, fan_out):
        return (jax.random.normal(k, (fan_in, fan_out), jnp.float32)
                / math.sqrt(fan_in))

    keys = iter(jax.random.split(key, n_layers * 8 + 4))
    layers = []
    for _ in range(n_layers):
        lp = {
            "g0": jnp.ones((1, D), jnp.float32),
            "b0": jnp.zeros((1, D), jnp.float32),
            "wq": dense(next(keys), D, D), "bq": jnp.zeros((1, D), jnp.float32),
            "wk": dense(next(keys), D, D), "bk": jnp.zeros((1, D), jnp.float32),
            "wv": dense(next(keys), D, D), "bv": jnp.zeros((1, D), jnp.float32),
            "wo": dense(next(keys), D, D), "bo": jnp.zeros((1, D), jnp.float32),
            "g1": jnp.ones((1, D), jnp.float32),
            "b1": jnp.zeros((1, D), jnp.float32),
            # GateBlock weight Linear(D, 2*d_hidden) split into a/b halves.
            "wa": dense(next(keys), D, d_hidden),
            "ba": jnp.zeros((1, d_hidden), jnp.float32),
            "wb": dense(next(keys), D, d_hidden),
            "bb": jnp.zeros((1, d_hidden), jnp.float32),
            "w2": dense(next(keys), d_hidden, D),
            "b2": jnp.zeros((1, D), jnp.float32),
        }
        layers.append(lp)
    head = {
        "g": jnp.ones((1, D), jnp.float32),
        "b": jnp.zeros((1, D), jnp.float32),
        "wh": dense(next(keys), D, out_dim),
        "bh": jnp.zeros((1, out_dim), jnp.float32),
    }
    return {"layers": layers, "head": head}


def fuse_params(params, *, D, n_heads, out_dim, lane_pad=128):
    """One-time weight transform: stack layers, fuse QKV / gate, fold the
    1/sqrt(d_head) softmax scale into W_q/b_q, cast matmul weights to bf16,
    lane-pad the head projection."""
    assert D % n_heads == 0, "input_dim must be divisible by n_heads"
    dh = D // n_heads
    scale = 1.0 / math.sqrt(dh)
    layers = params["layers"]
    mdt = jnp.bfloat16  # matmul-operand dtype (f32 accumulation in-kernel)

    wqkv = jnp.stack([jnp.concatenate(
        [lp["wq"] * scale, lp["wk"], lp["wv"]], axis=1) for lp in layers])
    bqkv = jnp.stack([jnp.concatenate(
        [lp["bq"] * scale, lp["bk"], lp["bv"]], axis=1) for lp in layers])
    wg = jnp.stack([jnp.concatenate([lp["wa"], lp["wb"]], axis=1)
                    for lp in layers])
    bg = jnp.stack([jnp.concatenate([lp["ba"], lp["bb"]], axis=1)
                    for lp in layers])

    head = params["head"]
    out_pad = max(lane_pad, out_dim)
    wh_pad = jnp.zeros((D, out_pad), jnp.float32).at[:, :out_dim].set(head["wh"])
    bh_pad = jnp.zeros((1, out_pad), jnp.float32).at[:, :out_dim].set(head["bh"])

    stack = lambda name: jnp.stack([lp[name] for lp in layers])
    return {
        # layer-stacked (leading dim = n_layers); layer 0's g0/b0 are unused
        # (statically skipped) — kept only to keep the stacked shapes uniform.
        "g0": stack("g0"), "b0": stack("b0"),
        "wqkv": wqkv.astype(mdt), "bqkv": bqkv,
        "wo": stack("wo").astype(mdt), "bo": stack("bo"),
        "g1": stack("g1"), "b1": stack("b1"),
        "wg": wg.astype(mdt), "bg": bg,
        "w2": stack("w2").astype(mdt), "b2": stack("b2"),
        # head
        "gh": head["g"], "bh": head["b"],
        "wh": wh_pad.astype(mdt), "bhead": bh_pad,
    }


# ----------------------------------- main -----------------------------------

if __name__ == "__main__":
    B, T, D = 2, 8, 32            # batch, n_tokens, input_dim
    n_heads = 2
    n_layers = 2
    output_dim = 4
    d_hidden = int(D * 1.0)       # d_ffn_factor = 1.0

    key = jax.random.PRNGKey(0)
    kp, kx = jax.random.split(key)
    params = init_params(kp, D=D, d_hidden=d_hidden,
                         n_layers=n_layers, out_dim=output_dim)
    fused = fuse_params(params, D=D, n_heads=n_heads, out_dim=output_dim)
    x = jax.random.normal(kx, (B, T, D), jnp.float32)

    y = transformer_forward(x, fused, n_layers=n_layers, n_heads=n_heads,
                            d_hidden=d_hidden, out_dim=output_dim)
    y = jax.block_until_ready(y)
    assert y.shape == (B, T, output_dim)
    assert bool(jnp.all(jnp.isfinite(y)))
    print("KERNEL_OK")
</pallas_src>

<mosaic_0001>
module attributes {stable_mosaic.version = 11 : i64} {
  func.func @_fused_transformer_kernel(%arg0: i32, %arg1: memref<16x32xf32, #tpu.memory_space<vmem>>, %arg2: memref<2x1x32xf32, #tpu.memory_space<vmem>>, %arg3: memref<2x1x32xf32, #tpu.memory_space<vmem>>, %arg4: memref<2x32x96xbf16, #tpu.memory_space<vmem>>, %arg5: memref<2x1x96xf32, #tpu.memory_space<vmem>>, %arg6: memref<2x32x32xbf16, #tpu.memory_space<vmem>>, %arg7: memref<2x1x32xf32, #tpu.memory_space<vmem>>, %arg8: memref<2x1x32xf32, #tpu.memory_space<vmem>>, %arg9: memref<2x1x32xf32, #tpu.memory_space<vmem>>, %arg10: memref<2x32x64xbf16, #tpu.memory_space<vmem>>, %arg11: memref<2x1x64xf32, #tpu.memory_space<vmem>>, %arg12: memref<2x32x32xbf16, #tpu.memory_space<vmem>>, %arg13: memref<2x1x32xf32, #tpu.memory_space<vmem>>, %arg14: memref<1x32xf32, #tpu.memory_space<vmem>>, %arg15: memref<1x32xf32, #tpu.memory_space<vmem>>, %arg16: memref<32x128xbf16, #tpu.memory_space<vmem>>, %arg17: memref<1x128xf32, #tpu.memory_space<vmem>>, %arg18: memref<16x128xf32, #tpu.memory_space<vmem>>) attributes {dimension_semantics = [#tpu.dimension_semantics<arbitrary>], iteration_bounds = array<i64: 1>, scalar_prefetch = 0 : i64, scratch_operands = 0 : i64, tpu.core_type = #tpu.core_type<tc>, window_params = [{pipeline_mode = #tpu.pipeline_mode<synchronous>, transform_indices = @transform_0, window_bounds = array<i64: 16, 32>}, {pipeline_mode = #tpu.pipeline_mode<synchronous>, transform_indices = @transform_1, window_bounds = array<i64: 2, 1, 32>}, {pipeline_mode = #tpu.pipeline_mode<synchronous>, transform_indices = @transform_2, window_bounds = array<i64: 2, 1, 32>}, {pipeline_mode = #tpu.pipeline_mode<synchronous>, transform_indices = @transform_3, window_bounds = array<i64: 2, 32, 96>}, {pipeline_mode = #tpu.pipeline_mode<synchronous>, transform_indices = @transform_4, window_bounds = array<i64: 2, 1, 96>}, {pipeline_mode = #tpu.pipeline_mode<synchronous>, transform_indices = @transform_5, window_bounds = array<i64: 2, 32, 32>}, {pipeline_mode = #tpu.pipeline_mode<synchronous>, transform_indices = @transform_6, window_bounds = array<i64: 2, 1, 32>}, {pipeline_mode = #tpu.pipeline_mode<synchronous>, transform_indices = @transform_7, window_bounds = array<i64: 2, 1, 32>}, {pipeline_mode = #tpu.pipeline_mode<synchronous>, transform_indices = @transform_8, window_bounds = array<i64: 2, 1, 32>}, {pipeline_mode = #tpu.pipeline_mode<synchronous>, transform_indices = @transform_9, window_bounds = array<i64: 2, 32, 64>}, {pipeline_mode = #tpu.pipeline_mode<synchronous>, transform_indices = @transform_10, window_bounds = array<i64: 2, 1, 64>}, {pipeline_mode = #tpu.pipeline_mode<synchronous>, transform_indices = @transform_11, window_bounds = array<i64: 2, 32, 32>}, {pipeline_mode = #tpu.pipeline_mode<synchronous>, transform_indices = @transform_12, window_bounds = array<i64: 2, 1, 32>}, {pipeline_mode = #tpu.pipeline_mode<synchronous>, transform_indices = @transform_13, window_bounds = array<i64: 1, 32>}, {pipeline_mode = #tpu.pipeline_mode<synchronous>, transform_indices = @transform_14, window_bounds = array<i64: 1, 32>}, {pipeline_mode = #tpu.pipeline_mode<synchronous>, transform_indices = @transform_15, window_bounds = array<i64: 32, 128>}, {pipeline_mode = #tpu.pipeline_mode<synchronous>, transform_indices = @transform_16, window_bounds = array<i64: 1, 128>}, {pipeline_mode = #tpu.pipeline_mode<synchronous>, transform_indices = @transform_17, window_bounds = array<i64: 16, 128>}]} {
    %c0 = arith.constant 0 : index
    %c0_0 = arith.constant 0 : index
    %0 = vector.load %arg1[%c0, %c0_0] : memref<16x32xf32, #tpu.memory_space<vmem>>, vector<16x32xf32>
    %1 = arith.truncf %0 : vector<16x32xf32> to vector<16x32xbf16>
    %c0_1 = arith.constant 0 : index
    %c0_2 = arith.constant 0 : index
    %c0_3 = arith.constant 0 : index
    %2 = vector.load %arg4[%c0_1, %c0_2, %c0_3] : memref<2x32x96xbf16, #tpu.memory_space<vmem>>, vector<1x32x96xbf16>
    %3 = vector.shape_cast %2 : vector<1x32x96xbf16> to vector<32x96xbf16>
    %cst = arith.constant dense<0.000000e+00> : vector<16x96xf32>
    %4 = tpu.matmul %1, %3, %cst {dimension_numbers = #tpu.dot_dimension_numbers<[1], [0], [0], [1], [0, 0, 1, 1], [], []>} : vector<16x32xbf16>, vector<32x96xbf16>, vector<16x96xf32> -> vector<16x96xf32>
    %c0_4 = arith.constant 0 : index
    %c0_5 = arith.constant 0 : index
    %c0_6 = arith.constant 0 : index
    %5 = vector.load %arg5[%c0_4, %c0_5, %c0_6] : memref<2x1x96xf32, #tpu.memory_space<vmem>>, vector<1x1x96xf32>
    %6 = vector.shape_cast %5 : vector<1x1x96xf32> to vector<1x96xf32>
    %7 = vector.broadcast %6 : vector<1x96xf32> to vector<16x96xf32>
    %8 = arith.addf %4, %7 : vector<16x96xf32>
    %9 = vector.extract_strided_slice %8 {offsets = [0, 0], sizes = [8, 16], strides = [1, 1]} : vector<16x96xf32> to vector<8x16xf32>
    %10 = arith.truncf %9 : vector<8x16xf32> to vector<8x16xbf16>
    %11 = vector.extract_strided_slice %8 {offsets = [0, 32], sizes = [8, 16], strides = [1, 1]} : vector<16x96xf32> to vector<8x16xf32>
    %12 = arith.truncf %11 : vector<8x16xf32> to vector<8x16xbf16>
    %13 = vector.extract_strided_slice %8 {offsets = [0, 64], sizes = [8, 16], strides = [1, 1]} : vector<16x96xf32> to vector<8x16xf32>
    %14 = arith.truncf %13 : vector<8x16xf32> to vector<8x16xbf16>
    %cst_7 = arith.constant dense<0.000000e+00> : vector<8x8xf32>
    %15 = tpu.matmul %10, %12, %cst_7 {dimension_numbers = #tpu.dot_dimension_numbers<[1], [1], [0], [0], [0, 0, 1, 0], [], []>} : vector<8x16xbf16>, vector<8x16xbf16>, vector<8x8xf32> -> vector<8x8xf32>
    %cst_8 = arith.constant dense<0xFF800000> : vector<8xf32>
    %16 = vector.multi_reduction <maximumf>, %15, %cst_8 [1] : vector<8x8xf32> to vector<8xf32>
    %17 = vector.shape_cast %16 : vector<8xf32> to vector<8x1xf32>
    %18 = vector.broadcast %17 : vector<8x1xf32> to vector<8x8xf32>
    %19 = arith.subf %15, %18 : vector<8x8xf32>
    %20 = math.exp %19 : vector<8x8xf32>
    %cst_9 = arith.constant dense<0.000000e+00> : vector<8xf32>
    %21 = vector.multi_reduction <add>, %20, %cst_9 [1] : vector<8x8xf32> to vector<8xf32>
    %22 = vector.shape_cast %21 : vector<8xf32> to vector<8x1xf32>
    %23 = tpu.reciprocal %22 {approx = true} : vector<8x1xf32> -> vector<8x1xf32>
    %24 = vector.broadcast %23 : vector<8x1xf32> to vector<8x8xf32>
    %25 = arith.mulf %20, %24 : vector<8x8xf32>
    %26 = arith.truncf %25 : vector<8x8xf32> to vector<8x8xbf16>
    %cst_10 = arith.constant dense<0.000000e+00> : vector<8x16xf32>
    %27 = tpu.matmul %26, %14, %cst_10 {dimension_numbers = #tpu.dot_dimension_numbers<[1], [0], [0], [1], [0, 0, 1, 1], [], []>} : vector<8x8xbf16>, vector<8x16xbf16>, vector<8x16xf32> -> vector<8x16xf32>
    %28 = vector.extract_strided_slice %8 {offsets = [0, 16], sizes = [8, 16], strides = [1, 1]} : vector<16x96xf32> to vector<8x16xf32>
    %29 = arith.truncf %28 : vector<8x16xf32> to vector<8x16xbf16>
    %30 = vector.extract_strided_slice %8 {offsets = [0, 48], sizes = [8, 16], strides = [1, 1]} : vector<16x96xf32> to vector<8x16xf32>
    %31 = arith.truncf %30 : vector<8x16xf32> to vector<8x16xbf16>
    %32 = vector.extract_strided_slice %8 {offsets = [0, 80], sizes = [8, 16], strides = [1, 1]} : vector<16x96xf32> to vector<8x16xf32>
    %33 = arith.truncf %32 : vector<8x16xf32> to vector<8x16xbf16>
    %cst_11 = arith.constant dense<0.000000e+00> : vector<8x8xf32>
    %34 = tpu.matmul %29, %31, %cst_11 {dimension_numbers = #tpu.dot_dimension_numbers<[1], [1], [0], [0], [0, 0, 1, 0], [], []>} : vector<8x16xbf16>, vector<8x16xbf16>, vector<8x8xf32> -> vector<8x8xf32>
    %cst_12 = arith.constant dense<0xFF800000> : vector<8xf32>
    %35 = vector.multi_reduction <maximumf>, %34, %cst_12 [1] : vector<8x8xf32> to vector<8xf32>
    %36 = vector.shape_cast %35 : vector<8xf32> to vector<8x1xf32>
    %37 = vector.broadcast %36 : vector<8x1xf32> to vector<8x8xf32>
    %38 = arith.subf %34, %37 : vector<8x8xf32>
    %39 = math.exp %38 : vector<8x8xf32>
    %cst_13 = arith.constant dense<0.000000e+00> : vector<8xf32>
    %40 = vector.multi_reduction <add>, %39, %cst_13 [1] : vector<8x8xf32> to vector<8xf32>
    %41 = vector.shape_cast %40 : vector<8xf32> to vector<8x1xf32>
    %42 = tpu.reciprocal %41 {approx = true} : vector<8x1xf32> -> vector<8x1xf32>
    %43 = vector.broadcast %42 : vector<8x1xf32> to vector<8x8xf32>
    %44 = arith.mulf %39, %43 : vector<8x8xf32>
    %45 = arith.truncf %44 : vector<8x8xf32> to vector<8x8xbf16>
    %cst_14 = arith.constant dense<0.000000e+00> : vector<8x16xf32>
    %46 = tpu.matmul %45, %33, %cst_14 {dimension_numbers = #tpu.dot_dimension_numbers<[1], [0], [0], [1], [0, 0, 1, 1], [], []>} : vector<8x8xbf16>, vector<8x16xbf16>, vector<8x16xf32> -> vector<8x16xf32>
    %47 = tpu.concatenate %27, %46 in 1 : vector<8x16xf32>, vector<8x16xf32> -> vector<8x32xf32>
    %48 = vector.extract_strided_slice %8 {offsets = [8, 0], sizes = [8, 16], strides = [1, 1]} : vector<16x96xf32> to vector<8x16xf32>
    %49 = arith.truncf %48 : vector<8x16xf32> to vector<8x16xbf16>
    %50 = vector.extract_strided_slice %8 {offsets = [8, 32], sizes = [8, 16], strides = [1, 1]} : vector<16x96xf32> to vector<8x16xf32>
    %51 = arith.truncf %50 : vector<8x16xf32> to vector<8x16xbf16>
    %52 = vector.extract_strided_slice %8 {offsets = [8, 64], sizes = [8, 16], strides = [1, 1]} : vector<16x96xf32> to vector<8x16xf32>
    %53 = arith.truncf %52 : vector<8x16xf32> to vector<8x16xbf16>
    %cst_15 = arith.constant dense<0.000000e+00> : vector<8x8xf32>
    %54 = tpu.matmul %49, %51, %cst_15 {dimension_numbers = #tpu.dot_dimension_numbers<[1], [1], [0], [0], [0, 0, 1, 0], [], []>} : vector<8x16xbf16>, vector<8x16xbf16>, vector<8x8xf32> -> vector<8x8xf32>
    %cst_16 = arith.constant dense<0xFF800000> : vector<8xf32>
    %55 = vector.multi_reduction <maximumf>, %54, %cst_16 [1] : vector<8x8xf32> to vector<8xf32>
    %56 = vector.shape_cast %55 : vector<8xf32> to vector<8x1xf32>
    %57 = vector.broadcast %56 : vector<8x1xf32> to vector<8x8xf32>
    %58 = arith.subf %54, %57 : vector<8x8xf32>
    %59 = math.exp %58 : vector<8x8xf32>
    %cst_17 = arith.constant dense<0.000000e+00> : vector<8xf32>
    %60 = vector.multi_reduction <add>, %59, %cst_17 [1] : vector<8x8xf32> to vector<8xf32>
    %61 = vector.shape_cast %60 : vector<8xf32> to vector<8x1xf32>
    %62 = tpu.reciprocal %61 {approx = true} : vector<8x1xf32> -> vector<8x1xf32>
    %63 = vector.broadcast %62 : vector<8x1xf32> to vector<8x8xf32>
    %64 = arith.mulf %59, %63 : vector<8x8xf32>
    %65 = arith.truncf %64 : vector<8x8xf32> to vector<8x8xbf16>
    %cst_18 = arith.constant dense<0.000000e+00> : vector<8x16xf32>
    %66 = tpu.matmul %65, %53, %cst_18 {dimension_numbers = #tpu.dot_dimension_numbers<[1], [0], [0], [1], [0, 0, 1, 1], [], []>} : vector<8x8xbf16>, vector<8x16xbf16>, vector<8x16xf32> -> vector<8x16xf32>
    %67 = vector.extract_strided_slice %8 {offsets = [8, 16], sizes = [8, 16], strides = [1, 1]} : vector<16x96xf32> to vector<8x16xf32>
    %68 = arith.truncf %67 : vector<8x16xf32> to vector<8x16xbf16>
    %69 = vector.extract_strided_slice %8 {offsets = [8, 48], sizes = [8, 16], strides = [1, 1]} : vector<16x96xf32> to vector<8x16xf32>
    %70 = arith.truncf %69 : vector<8x16xf32> to vector<8x16xbf16>
    %71 = vector.extract_strided_slice %8 {offsets = [8, 80], sizes = [8, 16], strides = [1, 1]} : vector<16x96xf32> to vector<8x16xf32>
    %72 = arith.truncf %71 : vector<8x16xf32> to vector<8x16xbf16>
    %cst_19 = arith.constant dense<0.000000e+00> : vector<8x8xf32>
    %73 = tpu.matmul %68, %70, %cst_19 {dimension_numbers = #tpu.dot_dimension_numbers<[1], [1], [0], [0], [0, 0, 1, 0], [], []>} : vector<8x16xbf16>, vector<8x16xbf16>, vector<8x8xf32> -> vector<8x8xf32>
    %cst_20 = arith.constant dense<0xFF800000> : vector<8xf32>
    %74 = vector.multi_reduction <maximumf>, %73, %cst_20 [1] : vector<8x8xf32> to vector<8xf32>
    %75 = vector.shape_cast %74 : vector<8xf32> to vector<8x1xf32>
    %76 = vector.broadcast %75 : vector<8x1xf32> to vector<8x8xf32>
    %77 = arith.subf %73, %76 : vector<8x8xf32>
    %78 = math.exp %77 : vector<8x8xf32>
    %cst_21 = arith.constant dense<0.000000e+00> : vector<8xf32>
    %79 = vector.multi_reduction <add>, %78, %cst_21 [1] : vector<8x8xf32> to vector<8xf32>
    %80 = vector.shape_cast %79 : vector<8xf32> to vector<8x1xf32>
    %81 = tpu.reciprocal %80 {approx = true} : vector<8x1xf32> -> vector<8x1xf32>
    %82 = vector.broadcast %81 : vector<8x1xf32> to vector<8x8xf32>
    %83 = arith.mulf %78, %82 : vector<8x8xf32>
    %84 = arith.truncf %83 : vector<8x8xf32> to vector<8x8xbf16>
    %cst_22 = arith.constant dense<0.000000e+00> : vector<8x16xf32>
    %85 = tpu.matmul %84, %72, %cst_22 {dimension_numbers = #tpu.dot_dimension_numbers<[1], [0], [0], [1], [0, 0, 1, 1], [], []>} : vector<8x8xbf16>, vector<8x16xbf16>, vector<8x16xf32> -> vector<8x16xf32>
    %86 = tpu.concatenate %66, %85 in 1 : vector<8x16xf32>, vector<8x16xf32> -> vector<8x32xf32>
    %87 = tpu.concatenate %47, %86 in 0 : vector<8x32xf32>, vector<8x32xf32> -> vector<16x32xf32>
    %88 = arith.truncf %87 : vector<16x32xf32> to vector<16x32xbf16>
    %c0_23 = arith.constant 0 : index
    %c0_24 = arith.constant 0 : index
    %c0_25 = arith.constant 0 : index
    %89 = vector.load %arg6[%c0_23, %c0_24, %c0_25] : memref<2x32x32xbf16, #tpu.memory_space<vmem>>, vector<1x32x32xbf16>
    %90 = vector.shape_cast %89 : vector<1x32x32xbf16> to vector<32x32xbf16>
    %cst_26 = arith.constant dense<0.000000e+00> : vector<16x32xf32>
    %91 = tpu.matmul %88, %90, %cst_26 {dimension_numbers = #tpu.dot_dimension_numbers<[1], [0], [0], [1], [0, 0, 1, 1], [], []>} : vector<16x32xbf16>, vector<32x32xbf16>, vector<16x32xf32> -> vector<16x32xf32>
    %92 = arith.addf %0, %91 : vector<16x32xf32>
    %c0_27 = arith.constant 0 : index
    %c0_28 = arith.constant 0 : index
    %c0_29 = arith.constant 0 : index
    %93 = vector.load %arg7[%c0_27, %c0_28, %c0_29] : memref<2x1x32xf32, #tpu.memory_space<vmem>>, vector<1x1x32xf32>
    %94 = vector.shape_cast %93 : vector<1x1x32xf32> to vector<1x32xf32>
    %95 = vector.broadcast %94 : vector<1x32xf32> to vector<16x32xf32>
    %96 = arith.addf %92, %95 : vector<16x32xf32>
    %c0_30 = arith.constant 0 : index
    %c0_31 = arith.constant 0 : index
    %c0_32 = arith.constant 0 : index
    %97 = vector.load %arg8[%c0_30, %c0_31, %c0_32] : memref<2x1x32xf32, #tpu.memory_space<vmem>>, vector<1x1x32xf32>
    %98 = vector.shape_cast %97 : vector<1x1x32xf32> to vector<1x32xf32>
    %c0_33 = arith.constant 0 : index
    %c0_34 = arith.constant 0 : index
    %c0_35 = arith.constant 0 : index
    %99 = vector.load %arg9[%c0_33, %c0_34, %c0_35] : memref<2x1x32xf32, #tpu.memory_space<vmem>>, vector<1x1x32xf32>
    %100 = vector.shape_cast %99 : vector<1x1x32xf32> to vector<1x32xf32>
    %cst_36 = arith.constant dense<0.000000e+00> : vector<16xf32>
    %101 = vector.multi_reduction <add>, %96, %cst_36 [1] : vector<16x32xf32> to vector<16xf32>
    %102 = vector.shape_cast %101 : vector<16xf32> to vector<16x1xf32>
    %cst_37 = arith.constant 3.200000e+01 : f32
    %103 = vector.broadcast %cst_37 : f32 to vector<16x1xf32>
    %104 = arith.divf %102, %103 : vector<16x1xf32>
    %105 = vector.broadcast %104 : vector<16x1xf32> to vector<16x32xf32>
    %106 = arith.subf %96, %105 : vector<16x32xf32>
    %107 = arith.mulf %106, %106 : vector<16x32xf32>
    %cst_38 = arith.constant dense<0.000000e+00> : vector<16xf32>
    %108 = vector.multi_reduction <add>, %107, %cst_38 [1] : vector<16x32xf32> to vector<16xf32>
    %109 = vector.shape_cast %108 : vector<16xf32> to vector<16x1xf32>
    %cst_39 = arith.constant 3.200000e+01 : f32
    %110 = vector.broadcast %cst_39 : f32 to vector<16x1xf32>
    %111 = arith.divf %109, %110 : vector<16x1xf32>
    %112 = vector.broadcast %104 : vector<16x1xf32> to vector<16x32xf32>
    %113 = arith.subf %96, %112 : vector<16x32xf32>
    %cst_40 = arith.constant 9.99999974E-6 : f32
    %114 = vector.broadcast %cst_40 : f32 to vector<16x1xf32>
    %115 = arith.addf %111, %114 : vector<16x1xf32>
    %116 = math.rsqrt %115 : vector<16x1xf32>
    %117 = vector.broadcast %116 : vector<16x1xf32> to vector<16x32xf32>
    %118 = arith.mulf %113, %117 : vector<16x32xf32>
    %119 = vector.broadcast %98 : vector<1x32xf32> to vector<16x32xf32>
    %120 = arith.mulf %118, %119 : vector<16x32xf32>
    %121 = vector.broadcast %100 : vector<1x32xf32> to vector<16x32xf32>
    %122 = arith.addf %120, %121 : vector<16x32xf32>
    %123 = arith.truncf %122 : vector<16x32xf32> to vector<16x32xbf16>
    %c0_41 = arith.constant 0 : index
    %c0_42 = arith.constant 0 : index
    %c0_43 = arith.constant 0 : index
    %124 = vector.load %arg10[%c0_41, %c0_42, %c0_43] : memref<2x32x64xbf16, #tpu.memory_space<vmem>>, vector<1x32x64xbf16>
    %125 = vector.shape_cast %124 : vector<1x32x64xbf16> to vector<32x64xbf16>
    %cst_44 = arith.constant dense<0.000000e+00> : vector<16x64xf32>
    %126 = tpu.matmul %123, %125, %cst_44 {dimension_numbers = #tpu.dot_dimension_numbers<[1], [0], [0], [1], [0, 0, 1, 1], [], []>} : vector<16x32xbf16>, vector<32x64xbf16>, vector<16x64xf32> -> vector<16x64xf32>
    %c0_45 = arith.constant 0 : index
    %c0_46 = arith.constant 0 : index
    %c0_47 = arith.constant 0 : index
    %127 = vector.load %arg11[%c0_45, %c0_46, %c0_47] : memref<2x1x64xf32, #tpu.memory_space<vmem>>, vector<1x1x64xf32>
    %128 = vector.shape_cast %127 : vector<1x1x64xf32> to vector<1x64xf32>
    %129 = vector.broadcast %128 : vector<1x64xf32> to vector<16x64xf32>
    %130 = arith.addf %126, %129 : vector<16x64xf32>
    %131 = vector.extract_strided_slice %130 {offsets = [0, 0], sizes = [16, 32], strides = [1, 1]} : vector<16x64xf32> to vector<16x32xf32>
    %132 = vector.extract_strided_slice %130 {offsets = [0, 32], sizes = [16, 32], strides = [1, 1]} : vector<16x64xf32> to vector<16x32xf32>
    %cst_48 = arith.constant 0.000000e+00 : f32
    %133 = vector.broadcast %cst_48 : f32 to vector<16x32xf32>
    %134 = arith.maximumf %132, %133 : vector<16x32xf32>
    %135 = arith.mulf %131, %134 : vector<16x32xf32>
    %136 = arith.truncf %135 : vector<16x32xf32> to vector<16x32xbf16>
    %c0_49 = arith.constant 0 : index
    %c0_50 = arith.constant 0 : index
    %c0_51 = arith.constant 0 : index
    %137 = vector.load %arg12[%c0_49, %c0_50, %c0_51] : memref<2x32x32xbf16, #tpu.memory_space<vmem>>, vector<1x32x32xbf16>
    %138 = vector.shape_cast %137 : vector<1x32x32xbf16> to vector<32x32xbf16>
    %cst_52 = arith.constant dense<0.000000e+00> : vector<16x32xf32>
    %139 = tpu.matmul %136, %138, %cst_52 {dimension_numbers = #tpu.dot_dimension_numbers<[1], [0], [0], [1], [0, 0, 1, 1], [], []>} : vector<16x32xbf16>, vector<32x32xbf16>, vector<16x32xf32> -> vector<16x32xf32>
    %140 = arith.addf %96, %139 : vector<16x32xf32>
    %c0_53 = arith.constant 0 : index
    %c0_54 = arith.constant 0 : index
    %c0_55 = arith.constant 0 : index
    %141 = vector.load %arg13[%c0_53, %c0_54, %c0_55] : memref<2x1x32xf32, #tpu.memory_space<vmem>>, vector<1x1x32xf32>
    %142 = vector.shape_cast %141 : vector<1x1x32xf32> to vector<1x32xf32>
    %143 = vector.broadcast %142 : vector<1x32xf32> to vector<16x32xf32>
    %144 = arith.addf %140, %143 : vector<16x32xf32>
    %c1 = arith.constant 1 : index
    %c0_56 = arith.constant 0 : index
    %c0_57 = arith.constant 0 : index
    %145 = vector.load %arg2[%c1, %c0_56, %c0_57] : memref<2x1x32xf32, #tpu.memory_space<vmem>>, vector<1x1x32xf32>
    %146 = vector.shape_cast %145 : vector<1x1x32xf32> to vector<1x32xf32>
    %c1_58 = arith.constant 1 : index
    %c0_59 = arith.constant 0 : index
    %c0_60 = arith.constant 0 : index
    %147 = vector.load %arg3[%c1_58, %c0_59, %c0_60] : memref<2x1x32xf32, #tpu.memory_space<vmem>>, vector<1x1x32xf32>
    %148 = vector.shape_cast %147 : vector<1x1x32xf32> to vector<1x32xf32>
    %cst_61 = arith.constant dense<0.000000e+00> : vector<16xf32>
    %149 = vector.multi_reduction <add>, %144, %cst_61 [1] : vector<16x32xf32> to vector<16xf32>
    %150 = vector.shape_cast %149 : vector<16xf32> to vector<16x1xf32>
    %cst_62 = arith.constant 3.200000e+01 : f32
    %151 = vector.broadcast %cst_62 : f32 to vector<16x1xf32>
    %152 = arith.divf %150, %151 : vector<16x1xf32>
    %153 = vector.broadcast %152 : vector<16x1xf32> to vector<16x32xf32>
    %154 = arith.subf %144, %153 : vector<16x32xf32>
    %155 = arith.mulf %154, %154 : vector<16x32xf32>
    %cst_63 = arith.constant dense<0.000000e+00> : vector<16xf32>
    %156 = vector.multi_reduction <add>, %155, %cst_63 [1] : vector<16x32xf32> to vector<16xf32>
    %157 = vector.shape_cast %156 : vector<16xf32> to vector<16x1xf32>
    %cst_64 = arith.constant 3.200000e+01 : f32
    %158 = vector.broadcast %cst_64 : f32 to vector<16x1xf32>
    %159 = arith.divf %157, %158 : vector<16x1xf32>
    %160 = vector.broadcast %152 : vector<16x1xf32> to vector<16x32xf32>
    %161 = arith.subf %144, %160 : vector<16x32xf32>
    %cst_65 = arith.constant 9.99999974E-6 : f32
    %162 = vector.broadcast %cst_65 : f32 to vector<16x1xf32>
    %163 = arith.addf %159, %162 : vector<16x1xf32>
    %164 = math.rsqrt %163 : vector<16x1xf32>
    %165 = vector.broadcast %164 : vector<16x1xf32> to vector<16x32xf32>
    %166 = arith.mulf %161, %165 : vector<16x32xf32>
    %167 = vector.broadcast %146 : vector<1x32xf32> to vector<16x32xf32>
    %168 = arith.mulf %166, %167 : vector<16x32xf32>
    %169 = vector.broadcast %148 : vector<1x32xf32> to vector<16x32xf32>
    %170 = arith.addf %168, %169 : vector<16x32xf32>
    %171 = arith.truncf %170 : vector<16x32xf32> to vector<16x32xbf16>
    %c1_66 = arith.constant 1 : index
    %c0_67 = arith.constant 0 : index
    %c0_68 = arith.constant 0 : index
    %172 = vector.load %arg4[%c1_66, %c0_67, %c0_68] : memref<2x32x96xbf16, #tpu.memory_space<vmem>>, vector<1x32x96xbf16>
    %173 = vector.shape_cast %172 : vector<1x32x96xbf16> to vector<32x96xbf16>
    %cst_69 = arith.constant dense<0.000000e+00> : vector<16x96xf32>
    %174 = tpu.matmul %171, %173, %cst_69 {dimension_numbers = #tpu.dot_dimension_numbers<[1], [0], [0], [1], [0, 0, 1, 1], [], []>} : vector<16x32xbf16>, vector<32x96xbf16>, vector<16x96xf32> -> vector<16x96xf32>
    %c1_70 = arith.constant 1 : index
    %c0_71 = arith.constant 0 : index
    %c0_72 = arith.constant 0 : index
    %175 = vector.load %arg5[%c1_70, %c0_71, %c0_72] : memref<2x1x96xf32, #tpu.memory_space<vmem>>, vector<1x1x96xf32>
    %176 = vector.shape_cast %175 : vector<1x1x96xf32> to vector<1x96xf32>
    %177 = vector.broadcast %176 : vector<1x96xf32> to vector<16x96xf32>
    %178 = arith.addf %174, %177 : vector<16x96xf32>
    %179 = vector.extract_strided_slice %178 {offsets = [0, 0], sizes = [8, 16], strides = [1, 1]} : vector<16x96xf32> to vector<8x16xf32>
    %180 = arith.truncf %179 : vector<8x16xf32> to vector<8x16xbf16>
    %181 = vector.extract_strided_slice %178 {offsets = [0, 32], sizes = [8, 16], strides = [1, 1]} : vector<16x96xf32> to vector<8x16xf32>
    %182 = arith.truncf %181 : vector<8x16xf32> to vector<8x16xbf16>
    %183 = vector.extract_strided_slice %178 {offsets = [0, 64], sizes = [8, 16], strides = [1, 1]} : vector<16x96xf32> to vector<8x16xf32>
    %184 = arith.truncf %183 : vector<8x16xf32> to vector<8x16xbf16>
    %cst_73 = arith.constant dense<0.000000e+00> : vector<8x8xf32>
    %185 = tpu.matmul %180, %182, %cst_73 {dimension_numbers = #tpu.dot_dimension_numbers<[1], [1], [0], [0], [0, 0, 1, 0], [], []>} : vector<8x16xbf16>, vector<8x16xbf16>, vector<8x8xf32> -> vector<8x8xf32>
    %cst_74 = arith.constant dense<0xFF800000> : vector<8xf32>
    %186 = vector.multi_reduction <maximumf>, %185, %cst_74 [1] : vector<8x8xf32> to vector<8xf32>
    %187 = vector.shape_cast %186 : vector<8xf32> to vector<8x1xf32>
    %188 = vector.broadcast %187 : vector<8x1xf32> to vector<8x8xf32>
    %189 = arith.subf %185, %188 : vector<8x8xf32>
    %190 = math.exp %189 : vector<8x8xf32>
    %cst_75 = arith.constant dense<0.000000e+00> : vector<8xf32>
    %191 = vector.multi_reduction <add>, %190, %cst_75 [1] : vector<8x8xf32> to vector<8xf32>
    %192 = vector.shape_cast %191 : vector<8xf32> to vector<8x1xf32>
    %193 = tpu.reciprocal %192 {approx = true} : vector<8x1xf32> -> vector<8x1xf32>
    %194 = vector.broadcast %193 : vector<8x1xf32> to vector<8x8xf32>
    %195 = arith.mulf %190, %194 : vector<8x8xf32>
    %196 = arith.truncf %195 : vector<8x8xf32> to vector<8x8xbf16>
    %cst_76 = arith.constant dense<0.000000e+00> : vector<8x16xf32>
    %197 = tpu.matmul %196, %184, %cst_76 {dimension_numbers = #tpu.dot_dimension_numbers<[1], [0], [0], [1], [0, 0, 1, 1], [], []>} : vector<8x8xbf16>, vector<8x16xbf16>, vector<8x16xf32> -> vector<8x16xf32>
    %198 = vector.extract_strided_slice %178 {offsets = [0, 16], sizes = [8, 16], strides = [1, 1]} : vector<16x96xf32> to vector<8x16xf32>
    %199 = arith.truncf %198 : vector<8x16xf32> to vector<8x16xbf16>
    %200 = vector.extract_strided_slice %178 {offsets = [0, 48], sizes = [8, 16], strides = [1, 1]} : vector<16x96xf32> to vector<8x16xf32>
    %201 = arith.truncf %200 : vector<8x16xf32> to vector<8x16xbf16>
    %202 = vector.extract_strided_slice %178 {offsets = [0, 80], sizes = [8, 16], strides = [1, 1]} : vector<16x96xf32> to vector<8x16xf32>
    %203 = arith.truncf %202 : vector<8x16xf32> to vector<8x16xbf16>
    %cst_77 = arith.constant dense<0.000000e+00> : vector<8x8xf32>
    %204 = tpu.matmul %199, %201, %cst_77 {dimension_numbers = #tpu.dot_dimension_numbers<[1], [1], [0], [0], [0, 0, 1, 0], [], []>} : vector<8x16xbf16>, vector<8x16xbf16>, vector<8x8xf32> -> vector<8x8xf32>
    %cst_78 = arith.constant dense<0xFF800000> : vector<8xf32>
    %205 = vector.multi_reduction <maximumf>, %204, %cst_78 [1] : vector<8x8xf32> to vector<8xf32>
    %206 = vector.shape_cast %205 : vector<8xf32> to vector<8x1xf32>
    %207 = vector.broadcast %206 : vector<8x1xf32> to vector<8x8xf32>
    %208 = arith.subf %204, %207 : vector<8x8xf32>
    %209 = math.exp %208 : vector<8x8xf32>
    %cst_79 = arith.constant dense<0.000000e+00> : vector<8xf32>
    %210 = vector.multi_reduction <add>, %209, %cst_79 [1] : vector<8x8xf32> to vector<8xf32>
    %211 = vector.shape_cast %210 : vector<8xf32> to vector<8x1xf32>
    %212 = tpu.reciprocal %211 {approx = true} : vector<8x1xf32> -> vector<8x1xf32>
    %213 = vector.broadcast %212 : vector<8x1xf32> to vector<8x8xf32>
    %214 = arith.mulf %209, %213 : vector<8x8xf32>
    %215 = arith.truncf %214 : vector<8x8xf32> to vector<8x8xbf16>
    %cst_80 = arith.constant dense<0.000000e+00> : vector<8x16xf32>
    %216 = tpu.matmul %215, %203, %cst_80 {dimension_numbers = #tpu.dot_dimension_numbers<[1], [0], [0], [1], [0, 0, 1, 1], [], []>} : vector<8x8xbf16>, vector<8x16xbf16>, vector<8x16xf32> -> vector<8x16xf32>
    %217 = tpu.concatenate %197, %216 in 1 : vector<8x16xf32>, vector<8x16xf32> -> vector<8x32xf32>
    %218 = vector.extract_strided_slice %178 {offsets = [8, 0], sizes = [8, 16], strides = [1, 1]} : vector<16x96xf32> to vector<8x16xf32>
    %219 = arith.truncf %218 : vector<8x16xf32> to vector<8x16xbf16>
    %220 = vector.extract_strided_slice %178 {offsets = [8, 32], sizes = [8, 16], strides = [1, 1]} : vector<16x96xf32> to vector<8x16xf32>
    %221 = arith.truncf %220 : vector<8x16xf32> to vector<8x16xbf16>
    %222 = vector.extract_strided_slice %178 {offsets = [8, 64], sizes = [8, 16], strides = [1, 1]} : vector<16x96xf32> to vector<8x16xf32>
    %223 = arith.truncf %222 : vector<8x16xf32> to vector<8x16xbf16>
    %cst_81 = arith.constant dense<0.000000e+00> : vector<8x8xf32>
    %224 = tpu.matmul %219, %221, %cst_81 {dimension_numbers = #tpu.dot_dimension_numbers<[1], [1], [0], [0], [0, 0, 1, 0], [], []>} : vector<8x16xbf16>, vector<8x16xbf16>, vector<8x8xf32> -> vector<8x8xf32>
    %cst_82 = arith.constant dense<0xFF800000> : vector<8xf32>
    %225 = vector.multi_reduction <maximumf>, %224, %cst_82 [1] : vector<8x8xf32> to vector<8xf32>
    %226 = vector.shape_cast %225 : vector<8xf32> to vector<8x1xf32>
    %227 = vector.broadcast %226 : vector<8x1xf32> to vector<8x8xf32>
    %228 = arith.subf %224, %227 : vector<8x8xf32>
    %229 = math.exp %228 : vector<8x8xf32>
    %cst_83 = arith.constant dense<0.000000e+00> : vector<8xf32>
    %230 = vector.multi_reduction <add>, %229, %cst_83 [1] : vector<8x8xf32> to vector<8xf32>
    %231 = vector.shape_cast %230 : vector<8xf32> to vector<8x1xf32>
    %232 = tpu.reciprocal %231 {approx = true} : vector<8x1xf32> -> vector<8x1xf32>
    %233 = vector.broadcast %232 : vector<8x1xf32> to vector<8x8xf32>
    %234 = arith.mulf %229, %233 : vector<8x8xf32>
    %235 = arith.truncf %234 : vector<8x8xf32> to vector<8x8xbf16>
    %cst_84 = arith.constant dense<0.000000e+00> : vector<8x16xf32>
    %236 = tpu.matmul %235, %223, %cst_84 {dimension_numbers = #tpu.dot_dimension_numbers<[1], [0], [0], [1], [0, 0, 1, 1], [], []>} : vector<8x8xbf16>, vector<8x16xbf16>, vector<8x16xf32> -> vector<8x16xf32>
    %237 = vector.extract_strided_slice %178 {offsets = [8, 16], sizes = [8, 16], strides = [1, 1]} : vector<16x96xf32> to vector<8x16xf32>
    %238 = arith.truncf %237 : vector<8x16xf32> to vector<8x16xbf16>
    %239 = vector.extract_strided_slice %178 {offsets = [8, 48], sizes = [8, 16], strides = [1, 1]} : vector<16x96xf32> to vector<8x16xf32>
    %240 = arith.truncf %239 : vector<8x16xf32> to vector<8x16xbf16>
    %241 = vector.extract_strided_slice %178 {offsets = [8, 80], sizes = [8, 16], strides = [1, 1]} : vector<16x96xf32> to vector<8x16xf32>
    %242 = arith.truncf %241 : vector<8x16xf32> to vector<8x16xbf16>
    %cst_85 = arith.constant dense<0.000000e+00> : vector<8x8xf32>
    %243 = tpu.matmul %238, %240, %cst_85 {dimension_numbers = #tpu.dot_dimension_numbers<[1], [1], [0], [0], [0, 0, 1, 0], [], []>} : vector<8x16xbf16>, vector<8x16xbf16>, vector<8x8xf32> -> vector<8x8xf32>
    %cst_86 = arith.constant dense<0xFF800000> : vector<8xf32>
    %244 = vector.multi_reduction <maximumf>, %243, %cst_86 [1] : vector<8x8xf32> to vector<8xf32>
    %245 = vector.shape_cast %244 : vector<8xf32> to vector<8x1xf32>
    %246 = vector.broadcast %245 : vector<8x1xf32> to vector<8x8xf32>
    %247 = arith.subf %243, %246 : vector<8x8xf32>
    %248 = math.exp %247 : vector<8x8xf32>
    %cst_87 = arith.constant dense<0.000000e+00> : vector<8xf32>
    %249 = vector.multi_reduction <add>, %248, %cst_87 [1] : vector<8x8xf32> to vector<8xf32>
    %250 = vector.shape_cast %249 : vector<8xf32> to vector<8x1xf32>
    %251 = tpu.reciprocal %250 {approx = true} : vector<8x1xf32> -> vector<8x1xf32>
    %252 = vector.broadcast %251 : vector<8x1xf32> to vector<8x8xf32>
    %253 = arith.mulf %248, %252 : vector<8x8xf32>
    %254 = arith.truncf %253 : vector<8x8xf32> to vector<8x8xbf16>
    %cst_88 = arith.constant dense<0.000000e+00> : vector<8x16xf32>
    %255 = tpu.matmul %254, %242, %cst_88 {dimension_numbers = #tpu.dot_dimension_numbers<[1], [0], [0], [1], [0, 0, 1, 1], [], []>} : vector<8x8xbf16>, vector<8x16xbf16>, vector<8x16xf32> -> vector<8x16xf32>
    %256 = tpu.concatenate %236, %255 in 1 : vector<8x16xf32>, vector<8x16xf32> -> vector<8x32xf32>
    %257 = tpu.concatenate %217, %256 in 0 : vector<8x32xf32>, vector<8x32xf32> -> vector<16x32xf32>
    %258 = arith.truncf %257 : vector<16x32xf32> to vector<16x32xbf16>
    %c1_89 = arith.constant 1 : index
    %c0_90 = arith.constant 0 : index
    %c0_91 = arith.constant 0 : index
    %259 = vector.load %arg6[%c1_89, %c0_90, %c0_91] : memref<2x32x32xbf16, #tpu.memory_space<vmem>>, vector<1x32x32xbf16>
    %260 = vector.shape_cast %259 : vector<1x32x32xbf16> to vector<32x32xbf16>
    %cst_92 = arith.constant dense<0.000000e+00> : vector<16x32xf32>
    %261 = tpu.matmul %258, %260, %cst_92 {dimension_numbers = #tpu.dot_dimension_numbers<[1], [0], [0], [1], [0, 0, 1, 1], [], []>} : vector<16x32xbf16>, vector<32x32xbf16>, vector<16x32xf32> -> vector<16x32xf32>
    %262 = arith.addf %144, %261 : vector<16x32xf32>
    %c1_93 = arith.constant 1 : index
    %c0_94 = arith.constant 0 : index
    %c0_95 = arith.constant 0 : index
    %263 = vector.load %arg7[%c1_93, %c0_94, %c0_95] : memref<2x1x32xf32, #tpu.memory_space<vmem>>, vector<1x1x32xf32>
    %264 = vector.shape_cast %263 : vector<1x1x32xf32> to vector<1x32xf32>
    %265 = vector.broadcast %264 : vector<1x32xf32> to vector<16x32xf32>
    %266 = arith.addf %262, %265 : vector<16x32xf32>
    %c1_96 = arith.constant 1 : index
    %c0_97 = arith.constant 0 : index
    %c0_98 = arith.constant 0 : index
    %267 = vector.load %arg8[%c1_96, %c0_97, %c0_98] : memref<2x1x32xf32, #tpu.memory_space<vmem>>, vector<1x1x32xf32>
    %268 = vector.shape_cast %267 : vector<1x1x32xf32> to vector<1x32xf32>
    %c1_99 = arith.constant 1 : index
    %c0_100 = arith.constant 0 : index
    %c0_101 = arith.constant 0 : index
    %269 = vector.load %arg9[%c1_99, %c0_100, %c0_101] : memref<2x1x32xf32, #tpu.memory_space<vmem>>, vector<1x1x32xf32>
    %270 = vector.shape_cast %269 : vector<1x1x32xf32> to vector<1x32xf32>
    %cst_102 = arith.constant dense<0.000000e+00> : vector<16xf32>
    %271 = vector.multi_reduction <add>, %266, %cst_102 [1] : vector<16x32xf32> to vector<16xf32>
    %272 = vector.shape_cast %271 : vector<16xf32> to vector<16x1xf32>
    %cst_103 = arith.constant 3.200000e+01 : f32
    %273 = vector.broadcast %cst_103 : f32 to vector<16x1xf32>
    %274 = arith.divf %272, %273 : vector<16x1xf32>
    %275 = vector.broadcast %274 : vector<16x1xf32> to vector<16x32xf32>
    %276 = arith.subf %266, %275 : vector<16x32xf32>
    %277 = arith.mulf %276, %276 : vector<16x32xf32>
    %cst_104 = arith.constant dense<0.000000e+00> : vector<16xf32>
    %278 = vector.multi_reduction <add>, %277, %cst_104 [1] : vector<16x32xf32> to vector<16xf32>
    %279 = vector.shape_cast %278 : vector<16xf32> to vector<16x1xf32>
    %cst_105 = arith.constant 3.200000e+01 : f32
    %280 = vector.broadcast %cst_105 : f32 to vector<16x1xf32>
    %281 = arith.divf %279, %280 : vector<16x1xf32>
    %282 = vector.broadcast %274 : vector<16x1xf32> to vector<16x32xf32>
    %283 = arith.subf %266, %282 : vector<16x32xf32>
    %cst_106 = arith.constant 9.99999974E-6 : f32
    %284 = vector.broadcast %cst_106 : f32 to vector<16x1xf32>
    %285 = arith.addf %281, %284 : vector<16x1xf32>
    %286 = math.rsqrt %285 : vector<16x1xf32>
    %287 = vector.broadcast %286 : vector<16x1xf32> to vector<16x32xf32>
    %288 = arith.mulf %283, %287 : vector<16x32xf32>
    %289 = vector.broadcast %268 : vector<1x32xf32> to vector<16x32xf32>
    %290 = arith.mulf %288, %289 : vector<16x32xf32>
    %291 = vector.broadcast %270 : vector<1x32xf32> to vector<16x32xf32>
    %292 = arith.addf %290, %291 : vector<16x32xf32>
    %293 = arith.truncf %292 : vector<16x32xf32> to vector<16x32xbf16>
    %c1_107 = arith.constant 1 : index
    %c0_108 = arith.constant 0 : index
    %c0_109 = arith.constant 0 : index
    %294 = vector.load %arg10[%c1_107, %c0_108, %c0_109] : memref<2x32x64xbf16, #tpu.memory_space<vmem>>, vector<1x32x64xbf16>
    %295 = vector.shape_cast %294 : vector<1x32x64xbf16> to vector<32x64xbf16>
    %cst_110 = arith.constant dense<0.000000e+00> : vector<16x64xf32>
    %296 = tpu.matmul %293, %295, %cst_110 {dimension_numbers = #tpu.dot_dimension_numbers<[1], [0], [0], [1], [0, 0, 1, 1], [], []>} : vector<16x32xbf16>, vector<32x64xbf16>, vector<16x64xf32> -> vector<16x64xf32>
    %c1_111 = arith.constant 1 : index
    %c0_112 = arith.constant 0 : index
    %c0_113 = arith.constant 0 : index
    %297 = vector.load %arg11[%c1_111, %c0_112, %c0_113] : memref<2x1x64xf32, #tpu.memory_space<vmem>>, vector<1x1x64xf32>
    %298 = vector.shape_cast %297 : vector<1x1x64xf32> to vector<1x64xf32>
    %299 = vector.broadcast %298 : vector<1x64xf32> to vector<16x64xf32>
    %300 = arith.addf %296, %299 : vector<16x64xf32>
    %301 = vector.extract_strided_slice %300 {offsets = [0, 0], sizes = [16, 32], strides = [1, 1]} : vector<16x64xf32> to vector<16x32xf32>
    %302 = vector.extract_strided_slice %300 {offsets = [0, 32], sizes = [16, 32], strides = [1, 1]} : vector<16x64xf32> to vector<16x32xf32>
    %cst_114 = arith.constant 0.000000e+00 : f32
    %303 = vector.broadcast %cst_114 : f32 to vector<16x32xf32>
    %304 = arith.maximumf %302, %303 : vector<16x32xf32>
    %305 = arith.mulf %301, %304 : vector<16x32xf32>
    %306 = arith.truncf %305 : vector<16x32xf32> to vector<16x32xbf16>
    %c1_115 = arith.constant 1 : index
    %c0_116 = arith.constant 0 : index
    %c0_117 = arith.constant 0 : index
    %307 = vector.load %arg12[%c1_115, %c0_116, %c0_117] : memref<2x32x32xbf16, #tpu.memory_space<vmem>>, vector<1x32x32xbf16>
    %308 = vector.shape_cast %307 : vector<1x32x32xbf16> to vector<32x32xbf16>
    %cst_118 = arith.constant dense<0.000000e+00> : vector<16x32xf32>
    %309 = tpu.matmul %306, %308, %cst_118 {dimension_numbers = #tpu.dot_dimension_numbers<[1], [0], [0], [1], [0, 0, 1, 1], [], []>} : vector<16x32xbf16>, vector<32x32xbf16>, vector<16x32xf32> -> vector<16x32xf32>
    %310 = arith.addf %266, %309 : vector<16x32xf32>
    %c1_119 = arith.constant 1 : index
    %c0_120 = arith.constant 0 : index
    %c0_121 = arith.constant 0 : index
    %311 = vector.load %arg13[%c1_119, %c0_120, %c0_121] : memref<2x1x32xf32, #tpu.memory_space<vmem>>, vector<1x1x32xf32>
    %312 = vector.shape_cast %311 : vector<1x1x32xf32> to vector<1x32xf32>
    %313 = vector.broadcast %312 : vector<1x32xf32> to vector<16x32xf32>
    %314 = arith.addf %310, %313 : vector<16x32xf32>
    %c0_122 = arith.constant 0 : index
    %c0_123 = arith.constant 0 : index
    %315 = vector.load %arg14[%c0_122, %c0_123] : memref<1x32xf32, #tpu.memory_space<vmem>>, vector<1x32xf32>
    %c0_124 = arith.constant 0 : index
    %c0_125 = arith.constant 0 : index
    %316 = vector.load %arg15[%c0_124, %c0_125] : memref<1x32xf32, #tpu.memory_space<vmem>>, vector<1x32xf32>
    %cst_126 = arith.constant dense<0.000000e+00> : vector<16xf32>
    %317 = vector.multi_reduction <add>, %314, %cst_126 [1] : vector<16x32xf32> to vector<16xf32>
    %318 = vector.shape_cast %317 : vector<16xf32> to vector<16x1xf32>
    %cst_127 = arith.constant 3.200000e+01 : f32
    %319 = vector.broadcast %cst_127 : f32 to vector<16x1xf32>
    %320 = arith.divf %318, %319 : vector<16x1xf32>
    %321 = vector.broadcast %320 : vector<16x1xf32> to vector<16x32xf32>
    %322 = arith.subf %314, %321 : vector<16x32xf32>
    %323 = arith.mulf %322, %322 : vector<16x32xf32>
    %cst_128 = arith.constant dense<0.000000e+00> : vector<16xf32>
    %324 = vector.multi_reduction <add>, %323, %cst_128 [1] : vector<16x32xf32> to vector<16xf32>
    %325 = vector.shape_cast %324 : vector<16xf32> to vector<16x1xf32>
    %cst_129 = arith.constant 3.200000e+01 : f32
    %326 = vector.broadcast %cst_129 : f32 to vector<16x1xf32>
    %327 = arith.divf %325, %326 : vector<16x1xf32>
    %328 = vector.broadcast %320 : vector<16x1xf32> to vector<16x32xf32>
    %329 = arith.subf %314, %328 : vector<16x32xf32>
    %cst_130 = arith.constant 9.99999974E-6 : f32
    %330 = vector.broadcast %cst_130 : f32 to vector<16x1xf32>
    %331 = arith.addf %327, %330 : vector<16x1xf32>
    %332 = math.rsqrt %331 : vector<16x1xf32>
    %333 = vector.broadcast %332 : vector<16x1xf32> to vector<16x32xf32>
    %334 = arith.mulf %329, %333 : vector<16x32xf32>
    %335 = vector.broadcast %315 : vector<1x32xf32> to vector<16x32xf32>
    %336 = arith.mulf %334, %335 : vector<16x32xf32>
    %337 = vector.broadcast %316 : vector<1x32xf32> to vector<16x32xf32>
    %338 = arith.addf %336, %337 : vector<16x32xf32>
    %cst_131 = arith.constant 0.000000e+00 : f32
    %339 = vector.broadcast %cst_131 : f32 to vector<16x32xf32>
    %340 = arith.maximumf %338, %339 : vector<16x32xf32>
    %341 = arith.truncf %340 : vector<16x32xf32> to vector<16x32xbf16>
    %c0_132 = arith.constant 0 : index
    %c0_133 = arith.constant 0 : index
    %342 = vector.load %arg16[%c0_132, %c0_133] : memref<32x128xbf16, #tpu.memory_space<vmem>>, vector<32x128xbf16>
    %cst_134 = arith.constant dense<0.000000e+00> : vector<16x128xf32>
    %343 = tpu.matmul %341, %342, %cst_134 {dimension_numbers = #tpu.dot_dimension_numbers<[1], [0], [0], [1], [0, 0, 1, 1], [], []>} : vector<16x32xbf16>, vector<32x128xbf16>, vector<16x128xf32> -> vector<16x128xf32>
    %c0_135 = arith.constant 0 : index
    %c0_136 = arith.constant 0 : index
    %344 = vector.load %arg17[%c0_135, %c0_136] : memref<1x128xf32, #tpu.memory_space<vmem>>, vector<1x128xf32>
    %345 = vector.broadcast %344 : vector<1x128xf32> to vector<16x128xf32>
    %346 = arith.addf %343, %345 : vector<16x128xf32>
    %c0_137 = arith.constant 0 : index
    %c0_138 = arith.constant 0 : index
    %347 = vector.load %arg18[%c0_137, %c0_138] : memref<16x128xf32, #tpu.memory_space<vmem>>, vector<16x128xf32>
    tpu.vector_store %arg18[%c0_137, %c0_138], %346 {strides = array<i32>} : memref<16x128xf32, #tpu.memory_space<vmem>>, vector<16x128xf32>,
    return
  }
  func.func @transform_0(%arg0: i32) -> (i32, i32) {
    %c0_i32 = arith.constant 0 : i32
    %c0_i32_0 = arith.constant 0 : i32
    %c0_i32_1 = arith.constant 0 : i32
    return %c0_i32, %c0_i32_0 : i32, i32
  }
  func.func @transform_1(%arg0: i32) -> (i32, i32, i32) {
    %c0_i32 = arith.constant 0 : i32
    %c0_i32_0 = arith.constant 0 : i32
    %c0_i32_1 = arith.constant 0 : i32
    %c0_i32_2 = arith.constant 0 : i32
    return %c0_i32, %c0_i32_0, %c0_i32_1 : i32, i32, i32
  }
  func.func @transform_2(%arg0: i32) -> (i32, i32, i32) {
    %c0_i32 = arith.constant 0 : i32
    %c0_i32_0 = arith.constant 0 : i32
    %c0_i32_1 = arith.constant 0 : i32
    %c0_i32_2 = arith.constant 0 : i32
    return %c0_i32, %c0_i32_0, %c0_i32_1 : i32, i32, i32
  }
  func.func @transform_3(%arg0: i32) -> (i32, i32, i32) {
    %c0_i32 = arith.constant 0 : i32
    %c0_i32_0 = arith.constant 0 : i32
    %c0_i32_1 = arith.constant 0 : i32
    %c0_i32_2 = arith.constant 0 : i32
    return %c0_i32, %c0_i32_0, %c0_i32_1 : i32, i32, i32
  }
  func.func @transform_4(%arg0: i32) -> (i32, i32, i32) {
    %c0_i32 = arith.constant 0 : i32
    %c0_i32_0 = arith.constant 0 : i32
    %c0_i32_1 = arith.constant 0 : i32
    %c0_i32_2 = arith.constant 0 : i32
    return %c0_i32, %c0_i32_0, %c0_i32_1 : i32, i32, i32
  }
  func.func @transform_5(%arg0: i32) -> (i32, i32, i32) {
    %c0_i32 = arith.constant 0 : i32
    %c0_i32_0 = arith.constant 0 : i32
    %c0_i32_1 = arith.constant 0 : i32
    %c0_i32_2 = arith.constant 0 : i32
    return %c0_i32, %c0_i32_0, %c0_i32_1 : i32, i32, i32
  }
  func.func @transform_6(%arg0: i32) -> (i32, i32, i32) {
    %c0_i32 = arith.constant 0 : i32
    %c0_i32_0 = arith.constant 0 : i32
    %c0_i32_1 = arith.constant 0 : i32
    %c0_i32_2 = arith.constant 0 : i32
    return %c0_i32, %c0_i32_0, %c0_i32_1 : i32, i32, i32
  }
  func.func @transform_7(%arg0: i32) -> (i32, i32, i32) {
    %c0_i32 = arith.constant 0 : i32
    %c0_i32_0 = arith.constant 0 : i32
    %c0_i32_1 = arith.constant 0 : i32
    %c0_i32_2 = arith.constant 0 : i32
    return %c0_i32, %c0_i32_0, %c0_i32_1 : i32, i32, i32
  }
  func.func @transform_8(%arg0: i32) -> (i32, i32, i32) {
    %c0_i32 = arith.constant 0 : i32
    %c0_i32_0 = arith.constant 0 : i32
    %c0_i32_1 = arith.constant 0 : i32
    %c0_i32_2 = arith.constant 0 : i32
    return %c0_i32, %c0_i32_0, %c0_i32_1 : i32, i32, i32
  }
  func.func @transform_9(%arg0: i32) -> (i32, i32, i32) {
    %c0_i32 = arith.constant 0 : i32
    %c0_i32_0 = arith.constant 0 : i32
    %c0_i32_1 = arith.constant 0 : i32
    %c0_i32_2 = arith.constant 0 : i32
    return %c0_i32, %c0_i32_0, %c0_i32_1 : i32, i32, i32
  }
  func.func @transform_10(%arg0: i32) -> (i32, i32, i32) {
    %c0_i32 = arith.constant 0 : i32
    %c0_i32_0 = arith.constant 0 : i32
    %c0_i32_1 = arith.constant 0 : i32
    %c0_i32_2 = arith.constant 0 : i32
    return %c0_i32, %c0_i32_0, %c0_i32_1 : i32, i32, i32
  }
  func.func @transform_11(%arg0: i32) -> (i32, i32, i32) {
    %c0_i32 = arith.constant 0 : i32
    %c0_i32_0 = arith.constant 0 : i32
    %c0_i32_1 = arith.constant 0 : i32
    %c0_i32_2 = arith.constant 0 : i32
    return %c0_i32, %c0_i32_0, %c0_i32_1 : i32, i32, i32
  }
  func.func @transform_12(%arg0: i32) -> (i32, i32, i32) {
    %c0_i32 = arith.constant 0 : i32
    %c0_i32_0 = arith.constant 0 : i32
    %c0_i32_1 = arith.constant 0 : i32
    %c0_i32_2 = arith.constant 0 : i32
    return %c0_i32, %c0_i32_0, %c0_i32_1 : i32, i32, i32
  }
  func.func @transform_13(%arg0: i32) -> (i32, i32) {
    %c0_i32 = arith.constant 0 : i32
    %c0_i32_0 = arith.constant 0 : i32
    %c0_i32_1 = arith.constant 0 : i32
    return %c0_i32, %c0_i32_0 : i32, i32
  }
  func.func @transform_14(%arg0: i32) -> (i32, i32) {
    %c0_i32 = arith.constant 0 : i32
    %c0_i32_0 = arith.constant 0 : i32
    %c0_i32_1 = arith.constant 0 : i32
    return %c0_i32, %c0_i32_0 : i32, i32
  }
  func.func @transform_15(%arg0: i32) -> (i32, i32) {
    %c0_i32 = arith.constant 0 : i32
    %c0_i32_0 = arith.constant 0 : i32
    %c0_i32_1 = arith.constant 0 : i32
    return %c0_i32, %c0_i32_0 : i32, i32
  }
  func.func @transform_16(%arg0: i32) -> (i32, i32) {
    %c0_i32 = arith.constant 0 : i32
    %c0_i32_0 = arith.constant 0 : i32
    %c0_i32_1 = arith.constant 0 : i32
    return %c0_i32, %c0_i32_0 : i32, i32
  }
  func.func @transform_17(%arg0: i32) -> (i32, i32) {
    %c0_i32 = arith.constant 0 : i32
    %c0_i32_0 = arith.constant 0 : i32
    %c0_i32_1 = arith.constant 0 : i32
    return %c0_i32, %c0_i32_0 : i32, i32
  }
}

</mosaic_0001>

<llo_original>
// kernel: tpu_custom_call.1
$region0: #{tpu_custom_call.1}
  #allocation0 [shape = 'u32[]', space=smem, size = 0x4, offset = 0x4, fixed_abs, tag = 'smem constant byte address 0x4 - core index']
  #allocation1 [shape = 'u32[144,128]{1,0:T(1,128)}', space=vmem, size = 0x12000, scoped, tag = 'internal scratch']
  %s0 = inlined_call_operand.hbm [shape: f32[16,32], index: 0, kind: input, shape index: {}]
  %s1 = inlined_call_operand.hbm [shape: f32[2,1,32], index: 1, kind: input, shape index: {}]
  %s2 = inlined_call_operand.vmem [shape: f32[2,1,32], index: 2, kind: input, shape index: {}]
  %s3 = inlined_call_operand.hbm [shape: bf16[2,32,96], index: 3, kind: input, shape index: {}]
  %s4 = inlined_call_operand.vmem [shape: f32[2,1,96], index: 4, kind: input, shape index: {}]
  %s5 = inlined_call_operand.hbm [shape: bf16[2,32,32], index: 5, kind: input, shape index: {}]
  %s6 = inlined_call_operand.vmem [shape: f32[2,1,32], index: 6, kind: input, shape index: {}]
  %s7 = inlined_call_operand.vmem [shape: f32[2,1,32], index: 7, kind: input, shape index: {}]
  %s8 = inlined_call_operand.vmem [shape: f32[2,1,32], index: 8, kind: input, shape index: {}]
  %s9 = inlined_call_operand.hbm [shape: bf16[2,32,64], index: 9, kind: input, shape index: {}]
  %s10 = inlined_call_operand.hbm [shape: f32[2,1,64], index: 10, kind: input, shape index: {}]
  %s11 = inlined_call_operand.hbm [shape: bf16[2,32,32], index: 11, kind: input, shape index: {}]
  %s12 = inlined_call_operand.hbm [shape: f32[2,1,32], index: 12, kind: input, shape index: {}]
  %s13 = inlined_call_operand.vmem [shape: f32[1,32], index: 13, kind: input, shape index: {}]
  %s14 = inlined_call_operand.hbm [shape: f32[1,32], index: 14, kind: input, shape index: {}]
  %s15 = inlined_call_operand.vmem [shape: bf16[32,128], index: 15, kind: input, shape index: {}]
  %s16 = inlined_call_operand.vmem [shape: f32[1,128], index: 16, kind: input, shape index: {}]
  %s17 = inlined_call_operand.hbm [shape: f32[16,128], index: 17, kind: output, shape index: {}]
  %s18 = sld [smem:[#allocation0]]
  $region114: #{tpu_custom_call.1} parent=0
    _
  %s20 = ssub.s32 1, %s18
  %s21 = scalar_select 0, %s20, %s18
  $region1: #{tpu_custom_call.1} parent=0
    #allocation2 [shape = 'u8[8192]{0}', space=vmem, size = 0x2000, scoped, tag = 'input window, operand 0, single buffered']
    #allocation3 [shape = 's32[1]{0}', space=sflag, size = 0x4, scoped, tag = 'scoped memory for tpu_custom_call.1']
    #allocation4 [shape = 's32[1]{0}', space=sflag, size = 0x4, scoped, tag = 'scoped memory for tpu_custom_call.1']
    #allocation5 [shape = 'u8[1024]{0}', space=vmem, size = 0x400, scoped, tag = 'input window, operand 1, single buffered']
    #allocation6 [shape = 's32[1]{0}', space=sflag, size = 0x4, scoped, tag = 'scoped memory for tpu_custom_call.1']
    #allocation7 [shape = 'u8[16384]{0}', space=vmem, size = 0x4000, scoped, tag = 'input window, operand 3, single buffered']
    #allocation8 [shape = 'u8[16384]{0}', space=vmem, size = 0x4000, scoped, tag = 'input window, operand 5, single buffered']
    #allocation9 [shape = 's32[1]{0}', space=sflag, size = 0x4, scoped, tag = 'scoped memory for tpu_custom_call.1']
    #allocation10 [shape = 'u8[16384]{0}', space=vmem, size = 0x4000, scoped, tag = 'input window, operand 9, single buffered']
    #allocation11 [shape = 'u8[1024]{0}', space=vmem, size = 0x400, scoped, tag = 'input window, operand 10, single buffered']
    #allocation12 [shape = 's32[1]{0}', space=sflag, size = 0x4, scoped, tag = 'scoped memory for tpu_custom_call.1']
    #allocation13 [shape = 'u8[16384]{0}', space=vmem, size = 0x4000, scoped, tag = 'input window, operand 11, single buffered']
    #allocation14 [shape = 'u8[1024]{0}', space=vmem, size = 0x400, scoped, tag = 'input window, operand 12, single buffered']
    #allocation15 [shape = 's32[1]{0}', space=sflag, size = 0x4, scoped, tag = 'scoped memory for tpu_custom_call.1']
    #allocation16 [shape = 'u8[512]{0}', space=vmem, size = 0x400, scoped, tag = 'input window, operand 14, single buffered']
    #allocation17 [shape = 'u8[8192]{0}', space=vmem, size = 0x2000, scoped, tag = 'output window, operand 0, single buffered']
    %22 = vsyncpa [#allocation3], 0
    %23 = vsyncpa [#allocation6], 0
    %24 = vsyncpa [#allocation9], 0
    %25 = vsyncpa [#allocation12], 0
    %26 = vsyncpa [#allocation15], 0
    %27 = vsyncpa [#allocation4], 0
    // Predicated region
    $region2: #{tpu_custom_call.1} parent=1 // pred_check
      _
    $region3: #{tpu_custom_call.1} parent=1 // pred_check_branch
      %29 = sbr.rel (0) target = $region5
    $region4: #{tpu_custom_call.1} parent=1 // pred_region
      %s31 = ssub.s32 256, 256
      %32 = vsyncadd [#allocation3], %s31
      %s33 = sshll.u32 [#allocation2], 4
      %s34 = int_to_ptr.vmem [resolvable:$true] %s33
      %39 = dma.hbm_to_vmem [thread:$0]  %s0, 256, %s34, [#allocation3], 128, 128, 8
    $region5: #{tpu_custom_call.1} parent=1 // pred_fallthru
      _
    // Predicated region
    $region6: #{tpu_custom_call.1} parent=1 // pred_check
      _
    $region7: #{tpu_custom_call.1} parent=1 // pred_check_branch
      %41 = sbr.rel (0) target = $region9
    $region8: #{tpu_custom_call.1} parent=1 // pred_region
      %s43 = ssub.s32 32, 32
      %44 = vsyncadd [#allocation6], %s43
      %s45 = sshll.u32 [#allocation5], 4
      %s46 = int_to_ptr.vmem [resolvable:$true] %s45
      %51 = dma.hbm_to_vmem [thread:$0]  %s1, 32, %s46, [#allocation6], 16, 16, 1
    $region9: #{tpu_custom_call.1} parent=1 // pred_fallthru
      _
    // Predicated region
    $region10: #{tpu_custom_call.1} parent=1 // pred_check
      _
    $region11: #{tpu_custom_call.1} parent=1 // pred_check_branch
      %53 = sbr.rel (0) target = $region13
    $region12: #{tpu_custom_call.1} parent=1 // pred_region
      _
    $region13: #{tpu_custom_call.1} parent=1 // pred_fallthru
      _
    // Predicated region
    $region14: #{tpu_custom_call.1} parent=1 // pred_check
      _
    $region15: #{tpu_custom_call.1} parent=1 // pred_check_branch
      %55 = sbr.rel (0) target = $region17
    $region16: #{tpu_custom_call.1} parent=1 // pred_region
      %s57 = ssub.s32 512, 512
      %58 = vsyncadd [#allocation6], %s57
      %s59 = sshll.u32 [#allocation7], 4
      %s60 = int_to_ptr.vmem [resolvable:$true] %s59
      %65 = dma.hbm_to_vmem [thread:$0]  %s3, 512, %s60, [#allocation6], 64, 64, 4
    $region17: #{tpu_custom_call.1} parent=1 // pred_fallthru
      _
    // Predicated region
    $region18: #{tpu_custom_call.1} parent=1 // pred_check
      _
    $region19: #{tpu_custom_call.1} parent=1 // pred_check_branch
      %67 = sbr.rel (0) target = $region21
    $region20: #{tpu_custom_call.1} parent=1 // pred_region
      _
    $region21: #{tpu_custom_call.1} parent=1 // pred_fallthru
      _
    // Predicated region
    $region22: #{tpu_custom_call.1} parent=1 // pred_check
      _
    $region23: #{tpu_custom_call.1} parent=1 // pred_check_branch
      %69 = sbr.rel (0) target = $region25
    $region24: #{tpu_custom_call.1} parent=1 // pred_region
      %s71 = ssub.s32 512, 512
      %72 = vsyncadd [#allocation9], %s71
      %s73 = sshll.u32 [#allocation8], 4
      %s74 = int_to_ptr.vmem [resolvable:$true] %s73
      %79 = dma.hbm_to_vmem [thread:$0]  %s5, 512, %s74, [#allocation9], 64, 64, 4
    $region25: #{tpu_custom_call.1} parent=1 // pred_fallthru
      _
    // Predicated region
    $region26: #{tpu_custom_call.1} parent=1 // pred_check
      _
    $region27: #{tpu_custom_call.1} parent=1 // pred_check_branch
      %81 = sbr.rel (0) target = $region29
    $region28: #{tpu_custom_call.1} parent=1 // pred_region
      _
    $region29: #{tpu_custom_call.1} parent=1 // pred_fallthru
      _
    // Predicated region
    $region30: #{tpu_custom_call.1} parent=1 // pred_check
      _
    $region31: #{tpu_custom_call.1} parent=1 // pred_check_branch
      %83 = sbr.rel (0) target = $region33
    $region32: #{tpu_custom_call.1} parent=1 // pred_region
      _
    $region33: #{tpu_custom_call.1} parent=1 // pred_fallthru
      _
    // Predicated region
    $region34: #{tpu_custom_call.1} parent=1 // pred_check
      _
    $region35: #{tpu_custom_call.1} parent=1 // pred_check_branch
      %85 = sbr.rel (0) target = $region37
    $region36: #{tpu_custom_call.1} parent=1 // pred_region
      _
    $region37: #{tpu_custom_call.1} parent=1 // pred_fallthru
      _
    // Predicated region
    $region38: #{tpu_custom_call.1} parent=1 // pred_check
      _
    $region39: #{tpu_custom_call.1} parent=1 // pred_check_branch
      %87 = sbr.rel (0) target = $region41
    $region40: #{tpu_custom_call.1} parent=1 // pred_region
      %s89 = ssub.s32 512, 512
      %90 = vsyncadd [#allocation9], %s89
      %s91 = sshll.u32 [#allocation10], 4
      %s92 = int_to_ptr.vmem [resolvable:$true] %s91
      %97 = dma.hbm_to_vmem [thread:$0]  %s9, 512, %s92, [#allocation9], 64, 64, 4
    $region41: #{tpu_custom_call.1} parent=1 // pred_fallthru
      _
    // Predicated region
    $region42: #{tpu_custom_call.1} parent=1 // pred_check
      _
    $region43: #{tpu_custom_call.1} parent=1 // pred_check_branch
      %99 = sbr.rel (0) target = $region45
    $region44: #{tpu_custom_call.1} parent=1 // pred_region
      %s101 = ssub.s32 32, 32
      %102 = vsyncadd [#allocation12], %s101
      %s103 = sshll.u32 [#allocation11], 4
      %s104 = int_to_ptr.vmem [resolvable:$true] %s103
      %109 = dma.hbm_to_vmem [thread:$0]  %s10, 32, %s104, [#allocation12], 16, 16, 1
    $region45: #{tpu_custom_call.1} parent=1 // pred_fallthru
      _
    // Predicated region
    $region46: #{tpu_custom_call.1} parent=1 // pred_check
      _
    $region47: #{tpu_custom_call.1} parent=1 // pred_check_branch
      %111 = sbr.rel (0) target = $region49
    $region48: #{tpu_custom_call.1} parent=1 // pred_region
      %s113 = ssub.s32 512, 512
      %114 = vsyncadd [#allocation12], %s113
      %s115 = sshll.u32 [#allocation13], 4
      %s116 = int_to_ptr.vmem [resolvable:$true] %s115
      %121 = dma.hbm_to_vmem [thread:$0]  %s11, 512, %s116, [#allocation12], 64, 64, 4
    $region49: #{tpu_custom_call.1} parent=1 // pred_fallthru
      _
    // Predicated region
    $region50: #{tpu_custom_call.1} parent=1 // pred_check
      _
    $region51: #{tpu_custom_call.1} parent=1 // pred_check_branch
      %123 = sbr.rel (0) target = $region53
    $region52: #{tpu_custom_call.1} parent=1 // pred_region
      %s125 = ssub.s32 32, 32
      %126 = vsyncadd [#allocation15], %s125
      %s127 = sshll.u32 [#allocation14], 4
      %s128 = int_to_ptr.vmem [resolvable:$true] %s127
      %133 = dma.hbm_to_vmem [thread:$0]  %s12, 32, %s128, [#allocation15], 16, 16, 1
    $region53: #{tpu_custom_call.1} parent=1 // pred_fallthru
      _
    // Predicated region
    $region54: #{tpu_custom_call.1} parent=1 // pred_check
      _
    $region55: #{tpu_custom_call.1} parent=1 // pred_check_branch
      %135 = sbr.rel (0) target = $region57
    $region56: #{tpu_custom_call.1} parent=1 // pred_region
      _
    $region57: #{tpu_custom_call.1} parent=1 // pred_fallthru
      _
    // Predicated region
    $region58: #{tpu_custom_call.1} parent=1 // pred_check
      _
    $region59: #{tpu_custom_call.1} parent=1 // pred_check_branch
      %137 = sbr.rel (0) target = $region61
    $region60: #{tpu_custom_call.1} parent=1 // pred_region
      %s139 = ssub.s32 16, 16
      %140 = vsyncadd [#allocation15], %s139
      %s142 = sshll.u32 [#allocation16], 4
      %s143 = int_to_ptr.vmem [resolvable:$true] %s142
      %145 = dma.hbm_to_vmem [thread:$0]  %s14, 16, %s143, [#allocation15]
    $region61: #{tpu_custom_call.1} parent=1 // pred_fallthru
      _
    // Predicated region
    $region62: #{tpu_custom_call.1} parent=1 // pred_check
      _
    $region63: #{tpu_custom_call.1} parent=1 // pred_check_branch
      %147 = sbr.rel (0) target = $region65
    $region64: #{tpu_custom_call.1} parent=1 // pred_region
      _
    $region65: #{tpu_custom_call.1} parent=1 // pred_fallthru
      _
    // Predicated region
    $region66: #{tpu_custom_call.1} parent=1 // pred_check
      _
    $region67: #{tpu_custom_call.1} parent=1 // pred_check_branch
      %149 = sbr.rel (0) target = $region69
    $region68: #{tpu_custom_call.1} parent=1 // pred_region
      _
    $region69: #{tpu_custom_call.1} parent=1 // pred_fallthru
      _
    // Predicated region
    $region70: #{tpu_custom_call.1} parent=1 // pred_check
      _
    $region71: #{tpu_custom_call.1} parent=1 // pred_check_branch
      %151 = sbr.rel (0) target = $region73
    $region72: #{tpu_custom_call.1} parent=1 // pred_region
      %152 = dma.done [#allocation3], 256
    $region73: #{tpu_custom_call.1} parent=1 // pred_fallthru
      _
    // Predicated region
    $region74: #{tpu_custom_call.1} parent=1 // pred_check
      _
    $region75: #{tpu_custom_call.1} parent=1 // pred_check_branch
      %154 = sbr.rel (0) target = $region77
    $region76: #{tpu_custom_call.1} parent=1 // pred_region
      %155 = dma.done [#allocation6], 32
    $region77: #{tpu_custom_call.1} parent=1 // pred_fallthru
      _
    // Predicated region
    $region78: #{tpu_custom_call.1} parent=1 // pred_check
      _
    $region79: #{tpu_custom_call.1} parent=1 // pred_check_branch
      %157 = sbr.rel (0) target = $region81
    $region80: #{tpu_custom_call.1} parent=1 // pred_region
      %158 = dma.done [#allocation6], 512
    $region81: #{tpu_custom_call.1} parent=1 // pred_fallthru
      _
    // Predicated region
    $region82: #{tpu_custom_call.1} parent=1 // pred_check
      _
    $region83: #{tpu_custom_call.1} parent=1 // pred_check_branch
      %160 = sbr.rel (0) target = $region85
    $region84: #{tpu_custom_call.1} parent=1 // pred_region
      %161 = dma.done [#allocation9], 512
    $region85: #{tpu_custom_call.1} parent=1 // pred_fallthru
      _
    // Predicated region
    $region86: #{tpu_custom_call.1} parent=1 // pred_check
      _
    $region87: #{tpu_custom_call.1} parent=1 // pred_check_branch
      %163 = sbr.rel (0) target = $region89
    $region88: #{tpu_custom_call.1} parent=1 // pred_region
      %164 = dma.done [#allocation9], 512
    $region89: #{tpu_custom_call.1} parent=1 // pred_fallthru
      _
    // Predicated region
    $region90: #{tpu_custom_call.1} parent=1 // pred_check
      _
    $region91: #{tpu_custom_call.1} parent=1 // pred_check_branch
      %166 = sbr.rel (0) target = $region93
    $region92: #{tpu_custom_call.1} parent=1 // pred_region
      %167 = dma.done [#allocation12], 32
    $region93: #{tpu_custom_call.1} parent=1 // pred_fallthru
      _
    // Predicated region
    $region94: #{tpu_custom_call.1} parent=1 // pred_check
      _
    $region95: #{tpu_custom_call.1} parent=1 // pred_check_branch
      %169 = sbr.rel (0) target = $region97
    $region96: #{tpu_custom_call.1} parent=1 // pred_region
      %170 = dma.done [#allocation12], 512
    $region97: #{tpu_custom_call.1} parent=1 // pred_fallthru
      _
    // Predicated region
    $region98: #{tpu_custom_call.1} parent=1 // pred_check
      _
    $region99: #{tpu_custom_call.1} parent=1 // pred_check_branch
      %172 = sbr.rel (0) target = $region101
    $region100: #{tpu_custom_call.1} parent=1 // pred_region
      %173 = dma.done [#allocation15], 32
    $region101: #{tpu_custom_call.1} parent=1 // pred_fallthru
      _
    // Predicated region
    $region102: #{tpu_custom_call.1} parent=1 // pred_check
      _
    $region103: #{tpu_custom_call.1} parent=1 // pred_check_branch
      %175 = sbr.rel (0) target = $region105
    $region104: #{tpu_custom_call.1} parent=1 // pred_region
      %176 = dma.done [#allocation15], 16
    $region105: #{tpu_custom_call.1} parent=1 // pred_fallthru
      _
    %v178 = vld [vmem:[#allocation2] sm:$0xff]
    %v179 = vld [vmem:[#allocation2 + $0x8] sm:$0xff]
    %v180 = vpack.c.bf16 %v179, %v178
    %v181 = vld [vmem:[#allocation7] sm:$0xf]
    %v182 = vld [vmem:[#allocation7 + $0x4] sm:$0xf]
    %v183 = vld [vmem:[#allocation7 + $0x8] sm:$0xf]
    %v184 = vld [vmem:[#allocation7 + $0xc] sm:$0xf]
    %v185 = vld [vmem:[%s4] sm:$0x1]
    %v187 = vlaneseq
    %v188 = vshrl.u32 %v187, 7
    %v189 = vsub.s32 0, %v188
    %v190 = vrot.slane %v185, %v189
    %v196 = vunpack.c.l.b16 %v181
    %v197 = vunpack.c.l.b16 %v182
    %v198 = vunpack.c.l.b16 %v183
    %v199 = vunpack.c.l.b16 %v184
    %v200 = vpack.c.b16 %v197, %v196
    %v201 = vpack.c.b16 %v199, %v198
    %vm204 = vcmask 261120
    %v206 = vsel %vm204, %v180, 0
    %208 = vmatprep.subr.bf16.mxu0 0
    %209 = vmatpush1.bf16.msra.mxu0 0
    %210 = vmatprep.subr.bf16.mxu0 0
    %211 = vmatpush1.bf16.msra.mxu0 0
    %212 = vmatprep.subr.bf16.mxu0 0
    %213 = vmatpush1.bf16.msra.mxu0 0
    %214 = vmatprep.subr.bf16.mxu0 0
    %215 = vmatpush1.bf16.msra.mxu0 0
    %216 = vmatprep.subr.bf16.mxu0 0
    %217 = vmatpush1.bf16.msra.mxu0 0
    %218 = vmatprep.subr.bf16.mxu0 0
    %219 = vmatpush1.bf16.msra.mxu0 0
    %220 = vmatprep.subr.bf16.mxu0 0
    %221 = vmatpush1.bf16.msra.mxu0 %v201
    %222 = vmatprep.subr.bf16.mxu0 0
    %223 = vmatpush1.bf16.msra.mxu0 %v200
    %224 = vmatprep.subr.bf16.mxu0 0
    %225 = vmatpush2.bf16.msra.mxu0 0
    %226 = vmatprep.subr.bf16.mxu0 0
    %227 = vmatpush2.bf16.msra.mxu0 0
    %228 = vmatprep.subr.bf16.mxu0 0
    %229 = vmatpush2.bf16.msra.mxu0 0
    %230 = vmatprep.subr.bf16.mxu0 0
    %231 = vmatpush2.bf16.msra.mxu0 0
    %232 = vmatprep.subr.bf16.mxu0 0
    %233 = vmatpush2.bf16.msra.mxu0 0
    %234 = vmatprep.subr.bf16.mxu0 0
    %235 = vmatpush2.bf16.msra.mxu0 0
    %236 = vmatprep.subr.bf16.mxu0 0
    %237 = vmatpush2.bf16.msra.mxu0 0
    %238 = vmatprep.subr.bf16.mxu0 0
    %239 = vmatpush2.bf16.msra.mxu0 0
    %240 = vmatprep.mubr.bf16.mxu0 0
    %241 = vmatmul.mubr.bf16.gmra.mxu0 %v206
    %v242 = vpop.f32.mrf.mxu0
    %v243 = vadd.f32 %v190, %v242
    %v244 = vpop.f32.mrf.mxu0
    %v245 = vpop.f32.mrf.mxu0
    %v246 = vadd.f32 %v190, %v245
    %v247 = vpop.f32.mrf.mxu0
    %248 = vdwg.mxu0
    %v249 = vpack.c.bf16 %v243, %v243
    %251 = vrot.lane.b32.xlu0 %v249, 96
    %v252 = vpop.permute.xlu0 %251
    %vm253 = vcmask 130048
    %v255 = vsel %vm253, %v249, 0
    %v258 = vsel %vm253, %v252, 0
    %260 = vmatprep.subr.bf16.mxu0 0
    %261 = vmatpush1.bf16.xpose.msra.mxu0 0
    %262 = vmatprep.subr.bf16.mxu0 0
    %263 = vmatpush1.bf16.xpose.msra.mxu0 0
    %264 = vmatprep.subr.bf16.mxu0 0
    %265 = vmatpush1.bf16.xpose.msra.mxu0 0
    %266 = vmatprep.subr.bf16.mxu0 0
    %267 = vmatpush1.bf16.xpose.msra.mxu0 0
    %268 = vmatprep.subr.bf16.mxu0 0
    %269 = vmatpush1.bf16.xpose.msra.mxu0 0
    %270 = vmatprep.subr.bf16.mxu0 0
    %271 = vmatpush1.bf16.xpose.msra.mxu0 0
    %272 = vmatprep.subr.bf16.mxu0 0
    %273 = vmatpush1.bf16.xpose.msra.mxu0 0
    %274 = vmatprep.subr.bf16.mxu0 0
    %275 = vmatpush1.bf16.xpose.msra.mxu0 %v258
    %276 = vmatprep.subr.bf16.mxu0 0
    %277 = vmatpush2.bf16.xpose.msra.mxu0 0
    %278 = vmatprep.subr.bf16.mxu0 0
    %279 = vmatpush2.bf16.xpose.msra.mxu0 0
    %280 = vmatprep.subr.bf16.mxu0 0
    %281 = vmatpush2.bf16.xpose.msra.mxu0 0
    %282 = vmatprep.subr.bf16.mxu0 0
    %283 = vmatpush2.bf16.xpose.msra.mxu0 0
    %284 = vmatprep.subr.bf16.mxu0 0
    %285 = vmatpush2.bf16.xpose.msra.mxu0 0
    %286 = vmatprep.subr.bf16.mxu0 0
    %287 = vmatpush2.bf16.xpose.msra.mxu0 0
    %288 = vmatprep.subr.bf16.mxu0 0
    %289 = vmatpush2.bf16.xpose.msra.mxu0 0
    %290 = vmatprep.subr.bf16.mxu0 0
    %291 = vmatpush2.bf16.xpose.msra.mxu0 0
    %292 = vmatprep.mubr.bf16.mxu0 0
    %293 = vmatmul.mubr.bf16.gmra.mxu0 %v255
    %v294 = vpop.f32.mrf.mxu0
    %v295 = vadd.f32 0.0, %v294
    %v296 = vpop.f32.mrf.mxu0
    %v297 = vpop.f32.mrf.mxu0
    %v298 = vpop.f32.mrf.mxu0
    %299 = vdwg.mxu0
    %vm300 = vcmask 64512
    %v301 = vsel %vm300, %v295, -inf
    %302 = vmax.xlane.f32.xlu0 %v301
    %v303 = vpop.xlane.xlu0 %302
    %v304 = vsub.f32 %v295, %v303
    %v305 = vmul.f32 %v304, 1.442695
    %v306 = vpow.pop %v305
    %v307 = vsel %vm300, %v306, 0.0
    %308 = vadd.xlane.f32.xlu0 %v307
    %v309 = vpop.xlane.xlu0 %308
    %v310 = vrcp.pop %v309
    %v311 = vmul.f32 %v306, %v310
    %v312 = vpack.c.bf16 %v311, %v311
    %313 = vrot.lane.b32.xlu0 %v249, 64
    %v314 = vpop.permute.xlu0 %313
    %v316 = vsel %vm300, %v312, 0
    %vm318 = vcmask 1043456
    %v320 = vsel %vm318, %v314, 0
    %322 = vmatprep.subr.bf16.mxu0 0
    %323 = vmatpush1.bf16.msra.mxu0 0
    %324 = vmatprep.subr.bf16.mxu0 0
    %325 = vmatpush1.bf16.msra.mxu0 0
    %326 = vmatprep.subr.bf16.mxu0 0
    %327 = vmatpush1.bf16.msra.mxu0 0
    %328 = vmatprep.subr.bf16.mxu0 0
    %329 = vmatpush1.bf16.msra.mxu0 0
    %330 = vmatprep.subr.bf16.mxu0 0
    %331 = vmatpush1.bf16.msra.mxu0 0
    %332 = vmatprep.subr.bf16.mxu0 0
    %333 = vmatpush1.bf16.msra.mxu0 0
    %334 = vmatprep.subr.bf16.mxu0 0
    %335 = vmatpush1.bf16.msra.mxu0 0
    %336 = vmatprep.subr.bf16.mxu0 0
    %337 = vmatpush1.bf16.msra.mxu0 %v320
    %338 = vmatprep.subr.bf16.mxu0 0
    %339 = vmatpush2.bf16.msra.mxu0 0
    %340 = vmatprep.subr.bf16.mxu0 0
    %341 = vmatpush2.bf16.msra.mxu0 0
    %342 = vmatprep.subr.bf16.mxu0 0
    %343 = vmatpush2.bf16.msra.mxu0 0
    %344 = vmatprep.subr.bf16.mxu0 0
    %345 = vmatpush2.bf16.msra.mxu0 0
    %346 = vmatprep.subr.bf16.mxu0 0
    %347 = vmatpush2.bf16.msra.mxu0 0
    %348 = vmatprep.subr.bf16.mxu0 0
    %349 = vmatpush2.bf16.msra.mxu0 0
    %350 = vmatprep.subr.bf16.mxu0 0
    %351 = vmatpush2.bf16.msra.mxu0 0
    %352 = vmatprep.subr.bf16.mxu0 0
    %353 = vmatpush2.bf16.msra.mxu0 0
    %354 = vmatprep.mubr.bf16.mxu0 0
    %355 = vmatmul.mubr.bf16.gmra.mxu0 %v316
    %v356 = vpop.f32.mrf.mxu0
    %v357 = vadd.f32 0.0, %v356
    %v358 = vpop.f32.mrf.mxu0
    %v359 = vpop.f32.mrf.mxu0
    %v360 = vpop.f32.mrf.mxu0
    %361 = vdwg.mxu0
    %362 = vrot.lane.b32.xlu0 %v249, 112
    %v363 = vpop.permute.xlu0 %362
    %364 = vrot.lane.b32.xlu0 %v249, 80
    %v365 = vpop.permute.xlu0 %364
    %v367 = vsel %vm253, %v363, 0
    %v370 = vsel %vm253, %v365, 0
    %372 = vmatprep.subr.bf16.mxu0 0
    %373 = vmatpush1.bf16.xpose.msra.mxu0 0
    %374 = vmatprep.subr.bf16.mxu0 0
    %375 = vmatpush1.bf16.xpose.msra.mxu0 0
    %376 = vmatprep.subr.bf16.mxu0 0
    %377 = vmatpush1.bf16.xpose.msra.mxu0 0
    %378 = vmatprep.subr.bf16.mxu0 0
    %379 = vmatpush1.bf16.xpose.msra.mxu0 0
    %380 = vmatprep.subr.bf16.mxu0 0
    %381 = vmatpush1.bf16.xpose.msra.mxu0 0
    %382 = vmatprep.subr.bf16.mxu0 0
    %383 = vmatpush1.bf16.xpose.msra.mxu0 0
    %384 = vmatprep.subr.bf16.mxu0 0
    %385 = vmatpush1.bf16.xpose.msra.mxu0 0
    %386 = vmatprep.subr.bf16.mxu0 0
    %387 = vmatpush1.bf16.xpose.msra.mxu0 %v370
    %388 = vmatprep.subr.bf16.mxu0 0
    %389 = vmatpush2.bf16.xpose.msra.mxu0 0
    %390 = vmatprep.subr.bf16.mxu0 0
    %391 = vmatpush2.bf16.xpose.msra.mxu0 0
    %392 = vmatprep.subr.bf16.mxu0 0
    %393 = vmatpush2.bf16.xpose.msra.mxu0 0
    %394 = vmatprep.subr.bf16.mxu0 0
    %395 = vmatpush2.bf16.xpose.msra.mxu0 0
    %396 = vmatprep.subr.bf16.mxu0 0
    %397 = vmatpush2.bf16.xpose.msra.mxu0 0
    %398 = vmatprep.subr.bf16.mxu0 0
    %399 = vmatpush2.bf16.xpose.msra.mxu0 0
    %400 = vmatprep.subr.bf16.mxu0 0
    %401 = vmatpush2.bf16.xpose.msra.mxu0 0
    %402 = vmatprep.subr.bf16.mxu0 0
    %403 = vmatpush2.bf16.xpose.msra.mxu0 0
    %404 = vmatprep.mubr.bf16.mxu0 0
    %405 = vmatmul.mubr.bf16.gmra.mxu0 %v367
    %v406 = vpop.f32.mrf.mxu0
    %v407 = vadd.f32 0.0, %v406
    %v408 = vpop.f32.mrf.mxu0
    %v409 = vpop.f32.mrf.mxu0
    %v410 = vpop.f32.mrf.mxu0
    %411 = vdwg.mxu0
    %v412 = vsel %vm300, %v407, -inf
    %413 = vmax.xlane.f32.xlu0 %v412
    %v414 = vpop.xlane.xlu0 %413
    %v415 = vsub.f32 %v407, %v414
    %v416 = vmul.f32 %v415, 1.442695
    %v417 = vpow.pop %v416
    %v418 = vsel %vm300, %v417, 0.0
    %419 = vadd.xlane.f32.xlu0 %v418
    %v420 = vpop.xlane.xlu0 %419
    %v421 = vrcp.pop %v420
    %v422 = vmul.f32 %v417, %v421
    %v423 = vpack.c.bf16 %v422, %v422
    %424 = vrot.lane.b32.xlu0 %v249, 48
    %v425 = vpop.permute.xlu0 %424
    %v427 = vsel %vm300, %v423, 0
    %v430 = vsel %vm318, %v425, 0
    %432 = vmatprep.subr.bf16.mxu0 0
    %433 = vmatpush1.bf16.msra.mxu0 0
    %434 = vmatprep.subr.bf16.mxu0 0
    %435 = vmatpush1.bf16.msra.mxu0 0
    %436 = vmatprep.subr.bf16.mxu0 0
    %437 = vmatpush1.bf16.msra.mxu0 0
    %438 = vmatprep.subr.bf16.mxu0 0
    %439 = vmatpush1.bf16.msra.mxu0 0
    %440 = vmatprep.subr.bf16.mxu0 0
    %441 = vmatpush1.bf16.msra.mxu0 0
    %442 = vmatprep.subr.bf16.mxu0 0
    %443 = vmatpush1.bf16.msra.mxu0 0
    %444 = vmatprep.subr.bf16.mxu0 0
    %445 = vmatpush1.bf16.msra.mxu0 0
    %446 = vmatprep.subr.bf16.mxu0 0
    %447 = vmatpush1.bf16.msra.mxu0 %v430
    %448 = vmatprep.subr.bf16.mxu0 0
    %449 = vmatpush2.bf16.msra.mxu0 0
    %450 = vmatprep.subr.bf16.mxu0 0
    %451 = vmatpush2.bf16.msra.mxu0 0
    %452 = vmatprep.subr.bf16.mxu0 0
    %453 = vmatpush2.bf16.msra.mxu0 0
    %454 = vmatprep.subr.bf16.mxu0 0
    %455 = vmatpush2.bf16.msra.mxu0 0
    %456 = vmatprep.subr.bf16.mxu0 0
    %457 = vmatpush2.bf16.msra.mxu0 0
    %458 = vmatprep.subr.bf16.mxu0 0
    %459 = vmatpush2.bf16.msra.mxu0 0
    %460 = vmatprep.subr.bf16.mxu0 0
    %461 = vmatpush2.bf16.msra.mxu0 0
    %462 = vmatprep.subr.bf16.mxu0 0
    %463 = vmatpush2.bf16.msra.mxu0 0
    %464 = vmatprep.mubr.bf16.mxu0 0
    %465 = vmatmul.mubr.bf16.gmra.mxu0 %v427
    %v466 = vpop.f32.mrf.mxu0
    %v467 = vadd.f32 0.0, %v466
    %v468 = vpop.f32.mrf.mxu0
    %v469 = vpop.f32.mrf.mxu0
    %v470 = vpop.f32.mrf.mxu0
    %471 = vdwg.mxu0
    %473 = vrot.lane.b32.xlu0 %v467, 16
    %v474 = vpop.permute.xlu0 %473
    %v476 = vsel %vm253, %v357, %v474
    %v477 = vpack.c.bf16 %v246, %v246
    %479 = vrot.lane.b32.xlu0 %v477, 96
    %v480 = vpop.permute.xlu0 %479
    %v482 = vsel %vm253, %v477, 0
    %v485 = vsel %vm253, %v480, 0
    %487 = vmatprep.subr.bf16.mxu0 0
    %488 = vmatpush1.bf16.xpose.msra.mxu0 0
    %489 = vmatprep.subr.bf16.mxu0 0
    %490 = vmatpush1.bf16.xpose.msra.mxu0 0
    %491 = vmatprep.subr.bf16.mxu0 0
    %492 = vmatpush1.bf16.xpose.msra.mxu0 0
    %493 = vmatprep.subr.bf16.mxu0 0
    %494 = vmatpush1.bf16.xpose.msra.mxu0 0
    %495 = vmatprep.subr.bf16.mxu0 0
    %496 = vmatpush1.bf16.xpose.msra.mxu0 0
    %497 = vmatprep.subr.bf16.mxu0 0
    %498 = vmatpush1.bf16.xpose.msra.mxu0 0
    %499 = vmatprep.subr.bf16.mxu0 0
    %500 = vmatpush1.bf16.xpose.msra.mxu0 0
    %501 = vmatprep.subr.bf16.mxu0 0
    %502 = vmatpush1.bf16.xpose.msra.mxu0 %v485
    %503 = vmatprep.subr.bf16.mxu0 0
    %504 = vmatpush2.bf16.xpose.msra.mxu0 0
    %505 = vmatprep.subr.bf16.mxu0 0
    %506 = vmatpush2.bf16.xpose.msra.mxu0 0
    %507 = vmatprep.subr.bf16.mxu0 0
    %508 = vmatpush2.bf16.xpose.msra.mxu0 0
    %509 = vmatprep.subr.bf16.mxu0 0
    %510 = vmatpush2.bf16.xpose.msra.mxu0 0
    %511 = vmatprep.subr.bf16.mxu0 0
    %512 = vmatpush2.bf16.xpose.msra.mxu0 0
    %513 = vmatprep.subr.bf16.mxu0 0
    %514 = vmatpush2.bf16.xpose.msra.mxu0 0
    %515 = vmatprep.subr.bf16.mxu0 0
    %516 = vmatpush2.bf16.xpose.msra.mxu0 0
    %517 = vmatprep.subr.bf16.mxu0 0
    %518 = vmatpush2.bf16.xpose.msra.mxu0 0
    %519 = vmatprep.mubr.bf16.mxu0 0
    %520 = vmatmul.mubr.bf16.gmra.mxu0 %v482
    %v521 = vpop.f32.mrf.mxu0
    %v522 = vadd.f32 0.0, %v521
    %v523 = vpop.f32.mrf.mxu0
    %v524 = vpop.f32.mrf.mxu0
    %v525 = vpop.f32.mrf.mxu0
    %526 = vdwg.mxu0
    %v527 = vsel %vm300, %v522, -inf
    %528 = vmax.xlane.f32.xlu0 %v527
    %v529 = vpop.xlane.xlu0 %528
    %v530 = vsub.f32 %v522, %v529
    %v531 = vmul.f32 %v530, 1.442695
    %v532 = vpow.pop %v531
    %v533 = vsel %vm300, %v532, 0.0
    %534 = vadd.xlane.f32.xlu0 %v533
    %v535 = vpop.xlane.xlu0 %534
    %v536 = vrcp.pop %v535
    %v537 = vmul.f32 %v532, %v536
    %v538 = vpack.c.bf16 %v537, %v537
    %539 = vrot.lane.b32.xlu0 %v477, 64
    %v540 = vpop.permute.xlu0 %539
    %v542 = vsel %vm300, %v538, 0
    %v545 = vsel %vm318, %v540, 0
    %547 = vmatprep.subr.bf16.mxu0 0
    %548 = vmatpush1.bf16.msra.mxu0 0
    %549 = vmatprep.subr.bf16.mxu0 0
    %550 = vmatpush1.bf16.msra.mxu0 0
    %551 = vmatprep.subr.bf16.mxu0 0
    %552 = vmatpush1.bf16.msra.mxu0 0
    %553 = vmatprep.subr.bf16.mxu0 0
    %554 = vmatpush1.bf16.msra.mxu0 0
    %555 = vmatprep.subr.bf16.mxu0 0
    %556 = vmatpush1.bf16.msra.mxu0 0
    %557 = vmatprep.subr.bf16.mxu0 0
    %558 = vmatpush1.bf16.msra.mxu0 0
    %559 = vmatprep.subr.bf16.mxu0 0
    %560 = vmatpush1.bf16.msra.mxu0 0
    %561 = vmatprep.subr.bf16.mxu0 0
    %562 = vmatpush1.bf16.msra.mxu0 %v545
    %563 = vmatprep.subr.bf16.mxu0 0
    %564 = vmatpush2.bf16.msra.mxu0 0
    %565 = vmatprep.subr.bf16.mxu0 0
    %566 = vmatpush2.bf16.msra.mxu0 0
    %567 = vmatprep.subr.bf16.mxu0 0
    %568 = vmatpush2.bf16.msra.mxu0 0
    %569 = vmatprep.subr.bf16.mxu0 0
    %570 = vmatpush2.bf16.msra.mxu0 0
    %571 = vmatprep.subr.bf16.mxu0 0
    %572 = vmatpush2.bf16.msra.mxu0 0
    %573 = vmatprep.subr.bf16.mxu0 0
    %574 = vmatpush2.bf16.msra.mxu0 0
    %575 = vmatprep.subr.bf16.mxu0 0
    %576 = vmatpush2.bf16.msra.mxu0 0
    %577 = vmatprep.subr.bf16.mxu0 0
    %578 = vmatpush2.bf16.msra.mxu0 0
    %579 = vmatprep.mubr.bf16.mxu0 0
    %580 = vmatmul.mubr.bf16.gmra.mxu0 %v542
    %v581 = vpop.f32.mrf.mxu0
    %v582 = vadd.f32 0.0, %v581
    %v583 = vpop.f32.mrf.mxu0
    %v584 = vpop.f32.mrf.mxu0
    %v585 = vpop.f32.mrf.mxu0
    %586 = vdwg.mxu0
    %587 = vrot.lane.b32.xlu0 %v477, 112
    %v588 = vpop.permute.xlu0 %587
    %589 = vrot.lane.b32.xlu0 %v477, 80
    %v590 = vpop.permute.xlu0 %589
    %v592 = vsel %vm253, %v588, 0
    %v595 = vsel %vm253, %v590, 0
    %597 = vmatprep.subr.bf16.mxu0 0
    %598 = vmatpush1.bf16.xpose.msra.mxu0 0
    %599 = vmatprep.subr.bf16.mxu0 0
    %600 = vmatpush1.bf16.xpose.msra.mxu0 0
    %601 = vmatprep.subr.bf16.mxu0 0
    %602 = vmatpush1.bf16.xpose.msra.mxu0 0
    %603 = vmatprep.subr.bf16.mxu0 0
    %604 = vmatpush1.bf16.xpose.msra.mxu0 0
    %605 = vmatprep.subr.bf16.mxu0 0
    %606 = vmatpush1.bf16.xpose.msra.mxu0 0
    %607 = vmatprep.subr.bf16.mxu0 0
    %608 = vmatpush1.bf16.xpose.msra.mxu0 0
    %609 = vmatprep.subr.bf16.mxu0 0
    %610 = vmatpush1.bf16.xpose.msra.mxu0 0
    %611 = vmatprep.subr.bf16.mxu0 0
    %612 = vmatpush1.bf16.xpose.msra.mxu0 %v595
    %613 = vmatprep.subr.bf16.mxu0 0
    %614 = vmatpush2.bf16.xpose.msra.mxu0 0
    %615 = vmatprep.subr.bf16.mxu0 0
    %616 = vmatpush2.bf16.xpose.msra.mxu0 0
    %617 = vmatprep.subr.bf16.mxu0 0
    %618 = vmatpush2.bf16.xpose.msra.mxu0 0
    %619 = vmatprep.subr.bf16.mxu0 0
    %620 = vmatpush2.bf16.xpose.msra.mxu0 0
    %621 = vmatprep.subr.bf16.mxu0 0
    %622 = vmatpush2.bf16.xpose.msra.mxu0 0
    %623 = vmatprep.subr.bf16.mxu0 0
    %624 = vmatpush2.bf16.xpose.msra.mxu0 0
    %625 = vmatprep.subr.bf16.mxu0 0
    %626 = vmatpush2.bf16.xpose.msra.mxu0 0
    %627 = vmatprep.subr.bf16.mxu0 0
    %628 = vmatpush2.bf16.xpose.msra.mxu0 0
    %629 = vmatprep.mubr.bf16.mxu0 0
    %630 = vmatmul.mubr.bf16.gmra.mxu0 %v592
    %v631 = vpop.f32.mrf.mxu0
    %v632 = vadd.f32 0.0, %v631
    %v633 = vpop.f32.mrf.mxu0
    %v634 = vpop.f32.mrf.mxu0
    %v635 = vpop.f32.mrf.mxu0
    %636 = vdwg.mxu0
    %v637 = vsel %vm300, %v632, -inf
    %638 = vmax.xlane.f32.xlu0 %v637
    %v639 = vpop.xlane.xlu0 %638
    %v640 = vsub.f32 %v632, %v639
    %v641 = vmul.f32 %v640, 1.442695
    %v642 = vpow.pop %v641
    %v643 = vsel %vm300, %v642, 0.0
    %644 = vadd.xlane.f32.xlu0 %v643
    %v645 = vpop.xlane.xlu0 %644
    %v646 = vrcp.pop %v645
    %v647 = vmul.f32 %v642, %v646
    %v648 = vpack.c.bf16 %v647, %v647
    %649 = vrot.lane.b32.xlu0 %v477, 48
    %v650 = vpop.permute.xlu0 %649
    %v652 = vsel %vm300, %v648, 0
    %v655 = vsel %vm318, %v650, 0
    %657 = vmatprep.subr.bf16.mxu0 0
    %658 = vmatpush1.bf16.msra.mxu0 0
    %659 = vmatprep.subr.bf16.mxu0 0
    %660 = vmatpush1.bf16.msra.mxu0 0
    %661 = vmatprep.subr.bf16.mxu0 0
    %662 = vmatpush1.bf16.msra.mxu0 0
    %663 = vmatprep.subr.bf16.mxu0 0
    %664 = vmatpush1.bf16.msra.mxu0 0
    %665 = vmatprep.subr.bf16.mxu0 0
    %666 = vmatpush1.bf16.msra.mxu0 0
    %667 = vmatprep.subr.bf16.mxu0 0
    %668 = vmatpush1.bf16.msra.mxu0 0
    %669 = vmatprep.subr.bf16.mxu0 0
    %670 = vmatpush1.bf16.msra.mxu0 0
    %671 = vmatprep.subr.bf16.mxu0 0
    %672 = vmatpush1.bf16.msra.mxu0 %v655
    %673 = vmatprep.subr.bf16.mxu0 0
    %674 = vmatpush2.bf16.msra.mxu0 0
    %675 = vmatprep.subr.bf16.mxu0 0
    %676 = vmatpush2.bf16.msra.mxu0 0
    %677 = vmatprep.subr.bf16.mxu0 0
    %678 = vmatpush2.bf16.msra.mxu0 0
    %679 = vmatprep.subr.bf16.mxu0 0
    %680 = vmatpush2.bf16.msra.mxu0 0
    %681 = vmatprep.subr.bf16.mxu0 0
    %682 = vmatpush2.bf16.msra.mxu0 0
    %683 = vmatprep.subr.bf16.mxu0 0
    %684 = vmatpush2.bf16.msra.mxu0 0
    %685 = vmatprep.subr.bf16.mxu0 0
    %686 = vmatpush2.bf16.msra.mxu0 0
    %687 = vmatprep.subr.bf16.mxu0 0
    %688 = vmatpush2.bf16.msra.mxu0 0
    %689 = vmatprep.mubr.bf16.mxu0 0
    %690 = vmatmul.mubr.bf16.gmra.mxu0 %v652
    %v691 = vpop.f32.mrf.mxu0
    %v692 = vadd.f32 0.0, %v691
    %v693 = vpop.f32.mrf.mxu0
    %v694 = vpop.f32.mrf.mxu0
    %v695 = vpop.f32.mrf.mxu0
    %696 = vdwg.mxu0
    %698 = vrot.lane.b32.xlu0 %v692, 16
    %v699 = vpop.permute.xlu0 %698
    %v701 = vsel %vm253, %v582, %v699
    %v702 = vpack.c.bf16 %v701, %v476
    %v703 = vld [vmem:[#allocation8] sm:$0xf]
    %v704 = vld [vmem:[#allocation8 + $0x4] sm:$0xf]
    %v705 = vld [vmem:[#allocation8 + $0x8] sm:$0xf]
    %v706 = vld [vmem:[#allocation8 + $0xc] sm:$0xf]
    %v711 = vunpack.c.l.b16 %v703
    %v712 = vunpack.c.l.b16 %v704
    %v713 = vunpack.c.l.b16 %v705
    %v714 = vunpack.c.l.b16 %v706
    %v715 = vpack.c.b16 %v712, %v711
    %v716 = vpack.c.b16 %v714, %v713
    %v720 = vsel %vm204, %v702, 0
    %722 = vmatprep.subr.bf16.mxu0 0
    %723 = vmatpush1.bf16.msra.mxu0 0
    %724 = vmatprep.subr.bf16.mxu0 0
    %725 = vmatpush1.bf16.msra.mxu0 0
    %726 = vmatprep.subr.bf16.mxu0 0
    %727 = vmatpush1.bf16.msra.mxu0 0
    %728 = vmatprep.subr.bf16.mxu0 0
    %729 = vmatpush1.bf16.msra.mxu0 0
    %730 = vmatprep.subr.bf16.mxu0 0
    %731 = vmatpush1.bf16.msra.mxu0 0
    %732 = vmatprep.subr.bf16.mxu0 0
    %733 = vmatpush1.bf16.msra.mxu0 0
    %734 = vmatprep.subr.bf16.mxu0 0
    %735 = vmatpush1.bf16.msra.mxu0 %v716
    %736 = vmatprep.subr.bf16.mxu0 0
    %737 = vmatpush1.bf16.msra.mxu0 %v715
    %738 = vmatprep.subr.bf16.mxu0 0
    %739 = vmatpush2.bf16.msra.mxu0 0
    %740 = vmatprep.subr.bf16.mxu0 0
    %741 = vmatpush2.bf16.msra.mxu0 0
    %742 = vmatprep.subr.bf16.mxu0 0
    %743 = vmatpush2.bf16.msra.mxu0 0
    %744 = vmatprep.subr.bf16.mxu0 0
    %745 = vmatpush2.bf16.msra.mxu0 0
    %746 = vmatprep.subr.bf16.mxu0 0
    %747 = vmatpush2.bf16.msra.mxu0 0
    %748 = vmatprep.subr.bf16.mxu0 0
    %749 = vmatpush2.bf16.msra.mxu0 0
    %750 = vmatprep.subr.bf16.mxu0 0
    %751 = vmatpush2.bf16.msra.mxu0 0
    %752 = vmatprep.subr.bf16.mxu0 0
    %753 = vmatpush2.bf16.msra.mxu0 0
    %754 = vmatprep.mubr.bf16.mxu0 0
    %755 = vmatmul.mubr.bf16.gmra.mxu0 %v720
    %v756 = vpop.f32.mrf.mxu0
    %v757 = vadd.f32 0.0, %v756
    %v758 = vpop.f32.mrf.mxu0
    %v759 = vpop.f32.mrf.mxu0
    %v760 = vadd.f32 0.0, %v759
    %v761 = vpop.f32.mrf.mxu0
    %762 = vdwg.mxu0
    %v763 = vadd.f32 %v178, %v757
    %v764 = vadd.f32 %v179, %v760
    %v765 = vld [vmem:[%s6] sm:$0x1]
    %v767 = vlaneseq
    %v768 = vshrl.u32 %v767, 7
    %v769 = vsub.s32 0, %v768
    %v770 = vrot.slane %v765, %v769
    %v772 = vadd.f32 %v763, %v770
    %v773 = vadd.f32 %v764, %v770
    %v774 = vld [vmem:[%s7] sm:$0x1]
    %v775 = vld [vmem:[%s8] sm:$0x1]
    %v776 = vsel %vm204, %v772, 0.0
    %777 = vadd.xlane.f32.xlu0 %v776
    %v778 = vpop.xlane.xlu0 %777
    %v779 = vsel %vm204, %v773, 0.0
    %780 = vadd.xlane.f32.xlu0 %v779
    %v781 = vpop.xlane.xlu0 %780
    %v782 = vrcp.pop 32.0
    %v783 = vmul.f32 %v778, %v782
    %v784 = vmul.f32 %v781, %v782
    %v785 = vsub.f32 %v772, %v783
    %v786 = vsub.f32 %v773, %v784
    %v787 = vmul.f32 %v785, %v785
    %v788 = vmul.f32 %v786, %v786
    %v789 = vsel %vm204, %v787, 0.0
    %790 = vadd.xlane.f32.xlu0 %v789
    %v791 = vpop.xlane.xlu0 %790
    %v792 = vsel %vm204, %v788, 0.0
    %793 = vadd.xlane.f32.xlu0 %v792
    %v794 = vpop.xlane.xlu0 %793
    %v795 = vmul.f32 %v791, %v782
    %v796 = vmul.f32 %v794, %v782
    %v797 = vadd.f32 %v795, 1e-05
    %v798 = vadd.f32 %v796, 1e-05
    %v799 = vrsqrt.pop %v797
    %v800 = vrsqrt.pop %v798
    %v801 = vmul.f32 %v785, %v799
    %v802 = vmul.f32 %v786, %v800
    %v804 = vlaneseq
    %v805 = vshrl.u32 %v804, 7
    %v806 = vsub.s32 0, %v805
    %v807 = vrot.slane %v774, %v806
    %v809 = vmul.f32 %v801, %v807
    %v810 = vmul.f32 %v802, %v807
    %v812 = vlaneseq
    %v813 = vshrl.u32 %v812, 7
    %v814 = vsub.s32 0, %v813
    %v815 = vrot.slane %v775, %v814
    %v817 = vadd.f32 %v809, %v815
    %v818 = vadd.f32 %v810, %v815
    %v819 = vpack.c.bf16 %v818, %v817
    %v820 = vld [vmem:[#allocation10] sm:$0xf]
    %v821 = vld [vmem:[#allocation10 + $0x4] sm:$0xf]
    %v822 = vld [vmem:[#allocation10 + $0x8] sm:$0xf]
    %v823 = vld [vmem:[#allocation10 + $0xc] sm:$0xf]
    %v824 = vld [vmem:[#allocation11] sm:$0x1]
    %v826 = vlaneseq
    %v827 = vshrl.u32 %v826, 7
    %v828 = vsub.s32 0, %v827
    %v829 = vrot.slane %v824, %v828
    %v835 = vunpack.c.l.b16 %v820
    %v836 = vunpack.c.l.b16 %v821
    %v837 = vunpack.c.l.b16 %v822
    %v838 = vunpack.c.l.b16 %v823
    %v839 = vpack.c.b16 %v836, %v835
    %v840 = vpack.c.b16 %v838, %v837
    %v844 = vsel %vm204, %v819, 0
    %846 = vmatprep.subr.bf16.mxu0 0
    %847 = vmatpush1.bf16.msra.mxu0 0
    %848 = vmatprep.subr.bf16.mxu0 0
    %849 = vmatpush1.bf16.msra.mxu0 0
    %850 = vmatprep.subr.bf16.mxu0 0
    %851 = vmatpush1.bf16.msra.mxu0 0
    %852 = vmatprep.subr.bf16.mxu0 0
    %853 = vmatpush1.bf16.msra.mxu0 0
    %854 = vmatprep.subr.bf16.mxu0 0
    %855 = vmatpush1.bf16.msra.mxu0 0
    %856 = vmatprep.subr.bf16.mxu0 0
    %857 = vmatpush1.bf16.msra.mxu0 0
    %858 = vmatprep.subr.bf16.mxu0 0
    %859 = vmatpush1.bf16.msra.mxu0 %v840
    %860 = vmatprep.subr.bf16.mxu0 0
    %861 = vmatpush1.bf16.msra.mxu0 %v839
    %862 = vmatprep.subr.bf16.mxu0 0
    %863 = vmatpush2.bf16.msra.mxu0 0
    %864 = vmatprep.subr.bf16.mxu0 0
    %865 = vmatpush2.bf16.msra.mxu0 0
    %866 = vmatprep.subr.bf16.mxu0 0
    %867 = vmatpush2.bf16.msra.mxu0 0
    %868 = vmatprep.subr.bf16.mxu0 0
    %869 = vmatpush2.bf16.msra.mxu0 0
    %870 = vmatprep.subr.bf16.mxu0 0
    %871 = vmatpush2.bf16.msra.mxu0 0
    %872 = vmatprep.subr.bf16.mxu0 0
    %873 = vmatpush2.bf16.msra.mxu0 0
    %874 = vmatprep.subr.bf16.mxu0 0
    %875 = vmatpush2.bf16.msra.mxu0 0
    %876 = vmatprep.subr.bf16.mxu0 0
    %877 = vmatpush2.bf16.msra.mxu0 0
    %878 = vmatprep.mubr.bf16.mxu0 0
    %879 = vmatmul.mubr.bf16.gmra.mxu0 %v844
    %v880 = vpop.f32.mrf.mxu0
    %v881 = vadd.f32 %v829, %v880
    %v882 = vpop.f32.mrf.mxu0
    %v883 = vpop.f32.mrf.mxu0
    %v884 = vadd.f32 %v829, %v883
    %v885 = vpop.f32.mrf.mxu0
    %886 = vdwg.mxu0
    %v887 = vmax.f32 %v881, 0.0
    %v888 = vmax.f32 %v884, 0.0
    %891 = vrot.lane.b32.xlu0 %v887, 96
    %v892 = vpop.permute.xlu0 %891
    %893 = vrot.lane.b32.xlu0 %v888, 96
    %v894 = vpop.permute.xlu0 %893
    %v897 = vmul.f32 %v881, %v892
    %v898 = vmul.f32 %v884, %v894
    %v899 = vpack.c.bf16 %v898, %v897
    %v900 = vld [vmem:[#allocation13] sm:$0xf]
    %v901 = vld [vmem:[#allocation13 + $0x4] sm:$0xf]
    %v902 = vld [vmem:[#allocation13 + $0x8] sm:$0xf]
    %v903 = vld [vmem:[#allocation13 + $0xc] sm:$0xf]
    %v908 = vunpack.c.l.b16 %v900
    %v909 = vunpack.c.l.b16 %v901
    %v910 = vunpack.c.l.b16 %v902
    %v911 = vunpack.c.l.b16 %v903
    %v912 = vpack.c.b16 %v909, %v908
    %v913 = vpack.c.b16 %v911, %v910
    %v917 = vsel %vm204, %v899, 0
    %919 = vmatprep.subr.bf16.mxu0 0
    %920 = vmatpush1.bf16.msra.mxu0 0
    %921 = vmatprep.subr.bf16.mxu0 0
    %922 = vmatpush1.bf16.msra.mxu0 0
    %923 = vmatprep.subr.bf16.mxu0 0
    %924 = vmatpush1.bf16.msra.mxu0 0
    %925 = vmatprep.subr.bf16.mxu0 0
    %926 = vmatpush1.bf16.msra.mxu0 0
    %927 = vmatprep.subr.bf16.mxu0 0
    %928 = vmatpush1.bf16.msra.mxu0 0
    %929 = vmatprep.subr.bf16.mxu0 0
    %930 = vmatpush1.bf16.msra.mxu0 0
    %931 = vmatprep.subr.bf16.mxu0 0
    %932 = vmatpush1.bf16.msra.mxu0 %v913
    %933 = vmatprep.subr.bf16.mxu0 0
    %934 = vmatpush1.bf16.msra.mxu0 %v912
    %935 = vmatprep.subr.bf16.mxu0 0
    %936 = vmatpush2.bf16.msra.mxu0 0
    %937 = vmatprep.subr.bf16.mxu0 0
    %938 = vmatpush2.bf16.msra.mxu0 0
    %939 = vmatprep.subr.bf16.mxu0 0
    %940 = vmatpush2.bf16.msra.mxu0 0
    %941 = vmatprep.subr.bf16.mxu0 0
    %942 = vmatpush2.bf16.msra.mxu0 0
    %943 = vmatprep.subr.bf16.mxu0 0
    %944 = vmatpush2.bf16.msra.mxu0 0
    %945 = vmatprep.subr.bf16.mxu0 0
    %946 = vmatpush2.bf16.msra.mxu0 0
    %947 = vmatprep.subr.bf16.mxu0 0
    %948 = vmatpush2.bf16.msra.mxu0 0
    %949 = vmatprep.subr.bf16.mxu0 0
    %950 = vmatpush2.bf16.msra.mxu0 0
    %951 = vmatprep.mubr.bf16.mxu0 0
    %952 = vmatmul.mubr.bf16.gmra.mxu0 %v917
    %v953 = vpop.f32.mrf.mxu0
    %v954 = vadd.f32 0.0, %v953
    %v955 = vpop.f32.mrf.mxu0
    %v956 = vpop.f32.mrf.mxu0
    %v957 = vadd.f32 0.0, %v956
    %v958 = vpop.f32.mrf.mxu0
    %959 = vdwg.mxu0
    %v960 = vadd.f32 %v772, %v954
    %v961 = vadd.f32 %v773, %v957
    %v962 = vld [vmem:[#allocation14] sm:$0x1]
    %v964 = vlaneseq
    %v965 = vshrl.u32 %v964, 7
    %v966 = vsub.s32 0, %v965
    %v967 = vrot.slane %v962, %v966
    %v969 = vadd.f32 %v960, %v967
    %v970 = vadd.f32 %v961, %v967
    %s971 = scalar_lea.vmem [#allocation5], 1
    %v972 = vld [vmem:[%s971] sm:$0x1]
    %s973 = scalar_lea.vmem %s2, 1
    %v974 = vld [vmem:[%s973] sm:$0x1]
    %v975 = vsel %vm204, %v969, 0.0
    %976 = vadd.xlane.f32.xlu0 %v975
    %v977 = vpop.xlane.xlu0 %976
    %v978 = vsel %vm204, %v970, 0.0
    %979 = vadd.xlane.f32.xlu0 %v978
    %v980 = vpop.xlane.xlu0 %979
    %v981 = vmul.f32 %v977, %v782
    %v982 = vmul.f32 %v980, %v782
    %v983 = vsub.f32 %v969, %v981
    %v984 = vsub.f32 %v970, %v982
    %v985 = vmul.f32 %v983, %v983
    %v986 = vmul.f32 %v984, %v984
    %v987 = vsel %vm204, %v985, 0.0
    %988 = vadd.xlane.f32.xlu0 %v987
    %v989 = vpop.xlane.xlu0 %988
    %v990 = vsel %vm204, %v986, 0.0
    %991 = vadd.xlane.f32.xlu0 %v990
    %v992 = vpop.xlane.xlu0 %991
    %v993 = vmul.f32 %v989, %v782
    %v994 = vmul.f32 %v992, %v782
    %v995 = vadd.f32 %v993, 1e-05
    %v996 = vadd.f32 %v994, 1e-05
    %v997 = vrsqrt.pop %v995
    %v998 = vrsqrt.pop %v996
    %v999 = vmul.f32 %v983, %v997
    %v1000 = vmul.f32 %v984, %v998
    %v1002 = vlaneseq
    %v1003 = vshrl.u32 %v1002, 7
    %v1004 = vsub.s32 0, %v1003
    %v1005 = vrot.slane %v972, %v1004
    %v1007 = vmul.f32 %v999, %v1005
    %v1008 = vmul.f32 %v1000, %v1005
    %v1010 = vlaneseq
    %v1011 = vshrl.u32 %v1010, 7
    %v1012 = vsub.s32 0, %v1011
    %v1013 = vrot.slane %v974, %v1012
    %v1015 = vadd.f32 %v1007, %v1013
    %v1016 = vadd.f32 %v1008, %v1013
    %v1017 = vpack.c.bf16 %v1016, %v1015
    %s1018 = scalar_lea.vmem [#allocation7], 16
    %v1019 = vld [vmem:[%s1018] sm:$0xf]
    %v1020 = vld [vmem:[%s1018 + $0x4] sm:$0xf]
    %v1021 = vld [vmem:[%s1018 + $0x8] sm:$0xf]
    %v1022 = vld [vmem:[%s1018 + $0xc] sm:$0xf]
    %s1023 = scalar_lea.vmem %s4, 1
    %v1024 = vld [vmem:[%s1023] sm:$0x1]
    %v1026 = vlaneseq
    %v1027 = vshrl.u32 %v1026, 7
    %v1028 = vsub.s32 0, %v1027
    %v1029 = vrot.slane %v1024, %v1028
    %v1035 = vunpack.c.l.b16 %v1019
    %v1036 = vunpack.c.l.b16 %v1020
    %v1037 = vunpack.c.l.b16 %v1021
    %v1038 = vunpack.c.l.b16 %v1022
    %v1039 = vpack.c.b16 %v1036, %v1035
    %v1040 = vpack.c.b16 %v1038, %v1037
    %v1044 = vsel %vm204, %v1017, 0
    %1046 = vmatprep.subr.bf16.mxu0 0
    %1047 = vmatpush1.bf16.msra.mxu0 0
    %1048 = vmatprep.subr.bf16.mxu0 0
    %1049 = vmatpush1.bf16.msra.mxu0 0
    %1050 = vmatprep.subr.bf16.mxu0 0
    %1051 = vmatpush1.bf16.msra.mxu0 0
    %1052 = vmatprep.subr.bf16.mxu0 0
    %1053 = vmatpush1.bf16.msra.mxu0 0
    %1054 = vmatprep.subr.bf16.mxu0 0
    %1055 = vmatpush1.bf16.msra.mxu0 0
    %1056 = vmatprep.subr.bf16.mxu0 0
    %1057 = vmatpush1.bf16.msra.mxu0 0
    %1058 = vmatprep.subr.bf16.mxu0 0
    %1059 = vmatpush1.bf16.msra.mxu0 %v1040
    %1060 = vmatprep.subr.bf16.mxu0 0
    %1061 = vmatpush1.bf16.msra.mxu0 %v1039
    %1062 = vmatprep.subr.bf16.mxu0 0
    %1063 = vmatpush2.bf16.msra.mxu0 0
    %1064 = vmatprep.subr.bf16.mxu0 0
    %1065 = vmatpush2.bf16.msra.mxu0 0
    %1066 = vmatprep.subr.bf16.mxu0 0
    %1067 = vmatpush2.bf16.msra.mxu0 0
    %1068 = vmatprep.subr.bf16.mxu0 0
    %1069 = vmatpush2.bf16.msra.mxu0 0
    %1070 = vmatprep.subr.bf16.mxu0 0
    %1071 = vmatpush2.bf16.msra.mxu0 0
    %1072 = vmatprep.subr.bf16.mxu0 0
    %1073 = vmatpush2.bf16.msra.mxu0 0
    %1074 = vmatprep.subr.bf16.mxu0 0
    %1075 = vmatpush2.bf16.msra.mxu0 0
    %1076 = vmatprep.subr.bf16.mxu0 0
    %1077 = vmatpush2.bf16.msra.mxu0 0
    %1078 = vmatprep.mubr.bf16.mxu0 0
    %1079 = vmatmul.mubr.bf16.gmra.mxu0 %v1044
    %v1080 = vpop.f32.mrf.mxu0
    %v1081 = vadd.f32 %v1029, %v1080
    %v1082 = vpop.f32.mrf.mxu0
    %v1083 = vpop.f32.mrf.mxu0
    %v1084 = vadd.f32 %v1029, %v1083
    %v1085 = vpop.f32.mrf.mxu0
    %1086 = vdwg.mxu0
    %v1087 = vpack.c.bf16 %v1081, %v1081
    %1089 = vrot.lane.b32.xlu0 %v1087, 96
    %v1090 = vpop.permute.xlu0 %1089
    %v1092 = vsel %vm253, %v1087, 0
    %v1095 = vsel %vm253, %v1090, 0
    %1097 = vmatprep.subr.bf16.mxu0 0
    %1098 = vmatpush1.bf16.xpose.msra.mxu0 0
    %1099 = vmatprep.subr.bf16.mxu0 0
    %1100 = vmatpush1.bf16.xpose.msra.mxu0 0
    %1101 = vmatprep.subr.bf16.mxu0 0
    %1102 = vmatpush1.bf16.xpose.msra.mxu0 0
    %1103 = vmatprep.subr.bf16.mxu0 0
    %1104 = vmatpush1.bf16.xpose.msra.mxu0 0
    %1105 = vmatprep.subr.bf16.mxu0 0
    %1106 = vmatpush1.bf16.xpose.msra.mxu0 0
    %1107 = vmatprep.subr.bf16.mxu0 0
    %1108 = vmatpush1.bf16.xpose.msra.mxu0 0
    %1109 = vmatprep.subr.bf16.mxu0 0
    %1110 = vmatpush1.bf16.xpose.msra.mxu0 0
    %1111 = vmatprep.subr.bf16.mxu0 0
    %1112 = vmatpush1.bf16.xpose.msra.mxu0 %v1095
    %1113 = vmatprep.subr.bf16.mxu0 0
    %1114 = vmatpush2.bf16.xpose.msra.mxu0 0
    %1115 = vmatprep.subr.bf16.mxu0 0
    %1116 = vmatpush2.bf16.xpose.msra.mxu0 0
    %1117 = vmatprep.subr.bf16.mxu0 0
    %1118 = vmatpush2.bf16.xpose.msra.mxu0 0
    %1119 = vmatprep.subr.bf16.mxu0 0
    %1120 = vmatpush2.bf16.xpose.msra.mxu0 0
    %1121 = vmatprep.subr.bf16.mxu0 0
    %1122 = vmatpush2.bf16.xpose.msra.mxu0 0
    %1123 = vmatprep.subr.bf16.mxu0 0
    %1124 = vmatpush2.bf16.xpose.msra.mxu0 0
    %1125 = vmatprep.subr.bf16.mxu0 0
    %1126 = vmatpush2.bf16.xpose.msra.mxu0 0
    %1127 = vmatprep.subr.bf16.mxu0 0
    %1128 = vmatpush2.bf16.xpose.msra.mxu0 0
    %1129 = vmatprep.mubr.bf16.mxu0 0
    %1130 = vmatmul.mubr.bf16.gmra.mxu0 %v1092
    %v1131 = vpop.f32.mrf.mxu0
    %v1132 = vadd.f32 0.0, %v1131
    %v1133 = vpop.f32.mrf.mxu0
    %v1134 = vpop.f32.mrf.mxu0
    %v1135 = vpop.f32.mrf.mxu0
    %1136 = vdwg.mxu0
    %v1137 = vsel %vm300, %v1132, -inf
    %1138 = vmax.xlane.f32.xlu0 %v1137
    %v1139 = vpop.xlane.xlu0 %1138
    %v1140 = vsub.f32 %v1132, %v1139
    %v1141 = vmul.f32 %v1140, 1.442695
    %v1142 = vpow.pop %v1141
    %v1143 = vsel %vm300, %v1142, 0.0
    %1144 = vadd.xlane.f32.xlu0 %v1143
    %v1145 = vpop.xlane.xlu0 %1144
    %v1146 = vrcp.pop %v1145
    %v1147 = vmul.f32 %v1142, %v1146
    %v1148 = vpack.c.bf16 %v1147, %v1147
    %1149 = vrot.lane.b32.xlu0 %v1087, 64
    %v1150 = vpop.permute.xlu0 %1149
    %v1152 = vsel %vm300, %v1148, 0
    %v1155 = vsel %vm318, %v1150, 0
    %1157 = vmatprep.subr.bf16.mxu0 0
    %1158 = vmatpush1.bf16.msra.mxu0 0
    %1159 = vmatprep.subr.bf16.mxu0 0
    %1160 = vmatpush1.bf16.msra.mxu0 0
    %1161 = vmatprep.subr.bf16.mxu0 0
    %1162 = vmatpush1.bf16.msra.mxu0 0
    %1163 = vmatprep.subr.bf16.mxu0 0
    %1164 = vmatpush1.bf16.msra.mxu0 0
    %1165 = vmatprep.subr.bf16.mxu0 0
    %1166 = vmatpush1.bf16.msra.mxu0 0
    %1167 = vmatprep.subr.bf16.mxu0 0
    %1168 = vmatpush1.bf16.msra.mxu0 0
    %1169 = vmatprep.subr.bf16.mxu0 0
    %1170 = vmatpush1.bf16.msra.mxu0 0
    %1171 = vmatprep.subr.bf16.mxu0 0
    %1172 = vmatpush1.bf16.msra.mxu0 %v1155
    %1173 = vmatprep.subr.bf16.mxu0 0
    %1174 = vmatpush2.bf16.msra.mxu0 0
    %1175 = vmatprep.subr.bf16.mxu0 0
    %1176 = vmatpush2.bf16.msra.mxu0 0
    %1177 = vmatprep.subr.bf16.mxu0 0
    %1178 = vmatpush2.bf16.msra.mxu0 0
    %1179 = vmatprep.subr.bf16.mxu0 0
    %1180 = vmatpush2.bf16.msra.mxu0 0
    %1181 = vmatprep.subr.bf16.mxu0 0
    %1182 = vmatpush2.bf16.msra.mxu0 0
    %1183 = vmatprep.subr.bf16.mxu0 0
    %1184 = vmatpush2.bf16.msra.mxu0 0
    %1185 = vmatprep.subr.bf16.mxu0 0
    %1186 = vmatpush2.bf16.msra.mxu0 0
    %1187 = vmatprep.subr.bf16.mxu0 0
    %1188 = vmatpush2.bf16.msra.mxu0 0
    %1189 = vmatprep.mubr.bf16.mxu0 0
    %1190 = vmatmul.mubr.bf16.gmra.mxu0 %v1152
    %v1191 = vpop.f32.mrf.mxu0
    %v1192 = vadd.f32 0.0, %v1191
    %v1193 = vpop.f32.mrf.mxu0
    %v1194 = vpop.f32.mrf.mxu0
    %v1195 = vpop.f32.mrf.mxu0
    %1196 = vdwg.mxu0
    %1197 = vrot.lane.b32.xlu0 %v1087, 112
    %v1198 = vpop.permute.xlu0 %1197
    %1199 = vrot.lane.b32.xlu0 %v1087, 80
    %v1200 = vpop.permute.xlu0 %1199
    %v1202 = vsel %vm253, %v1198, 0
    %v1205 = vsel %vm253, %v1200, 0
    %1207 = vmatprep.subr.bf16.mxu0 0
    %1208 = vmatpush1.bf16.xpose.msra.mxu0 0
    %1209 = vmatprep.subr.bf16.mxu0 0
    %1210 = vmatpush1.bf16.xpose.msra.mxu0 0
    %1211 = vmatprep.subr.bf16.mxu0 0
    %1212 = vmatpush1.bf16.xpose.msra.mxu0 0
    %1213 = vmatprep.subr.bf16.mxu0 0
    %1214 = vmatpush1.bf16.xpose.msra.mxu0 0
    %1215 = vmatprep.subr.bf16.mxu0 0
    %1216 = vmatpush1.bf16.xpose.msra.mxu0 0
    %1217 = vmatprep.subr.bf16.mxu0 0
    %1218 = vmatpush1.bf16.xpose.msra.mxu0 0
    %1219 = vmatprep.subr.bf16.mxu0 0
    %1220 = vmatpush1.bf16.xpose.msra.mxu0 0
    %1221 = vmatprep.subr.bf16.mxu0 0
    %1222 = vmatpush1.bf16.xpose.msra.mxu0 %v1205
    %1223 = vmatprep.subr.bf16.mxu0 0
    %1224 = vmatpush2.bf16.xpose.msra.mxu0 0
    %1225 = vmatprep.subr.bf16.mxu0 0
    %1226 = vmatpush2.bf16.xpose.msra.mxu0 0
    %1227 = vmatprep.subr.bf16.mxu0 0
    %1228 = vmatpush2.bf16.xpose.msra.mxu0 0
    %1229 = vmatprep.subr.bf16.mxu0 0
    %1230 = vmatpush2.bf16.xpose.msra.mxu0 0
    %1231 = vmatprep.subr.bf16.mxu0 0
    %1232 = vmatpush2.bf16.xpose.msra.mxu0 0
    %1233 = vmatprep.subr.bf16.mxu0 0
    %1234 = vmatpush2.bf16.xpose.msra.mxu0 0
    %1235 = vmatprep.subr.bf16.mxu0 0
    %1236 = vmatpush2.bf16.xpose.msra.mxu0 0
    %1237 = vmatprep.subr.bf16.mxu0 0
    %1238 = vmatpush2.bf16.xpose.msra.mxu0 0
    %1239 = vmatprep.mubr.bf16.mxu0 0
    %1240 = vmatmul.mubr.bf16.gmra.mxu0 %v1202
    %v1241 = vpop.f32.mrf.mxu0
    %v1242 = vadd.f32 0.0, %v1241
    %v1243 = vpop.f32.mrf.mxu0
    %v1244 = vpop.f32.mrf.mxu0
    %v1245 = vpop.f32.mrf.mxu0
    %1246 = vdwg.mxu0
    %v1247 = vsel %vm300, %v1242, -inf
    %1248 = vmax.xlane.f32.xlu0 %v1247
    %v1249 = vpop.xlane.xlu0 %1248
    %v1250 = vsub.f32 %v1242, %v1249
    %v1251 = vmul.f32 %v1250, 1.442695
    %v1252 = vpow.pop %v1251
    %v1253 = vsel %vm300, %v1252, 0.0
    %1254 = vadd.xlane.f32.xlu0 %v1253
    %v1255 = vpop.xlane.xlu0 %1254
    %v1256 = vrcp.pop %v1255
    %v1257 = vmul.f32 %v1252, %v1256
    %v1258 = vpack.c.bf16 %v1257, %v1257
    %1259 = vrot.lane.b32.xlu0 %v1087, 48
    %v1260 = vpop.permute.xlu0 %1259
    %v1262 = vsel %vm300, %v1258, 0
    %v1265 = vsel %vm318, %v1260, 0
    %1267 = vmatprep.subr.bf16.mxu0 0
    %1268 = vmatpush1.bf16.msra.mxu0 0
    %1269 = vmatprep.subr.bf16.mxu0 0
    %1270 = vmatpush1.bf16.msra.mxu0 0
    %1271 = vmatprep.subr.bf16.mxu0 0
    %1272 = vmatpush1.bf16.msra.mxu0 0
    %1273 = vmatprep.subr.bf16.mxu0 0
    %1274 = vmatpush1.bf16.msra.mxu0 0
    %1275 = vmatprep.subr.bf16.mxu0 0
    %1276 = vmatpush1.bf16.msra.mxu0 0
    %1277 = vmatprep.subr.bf16.mxu0 0
    %1278 = vmatpush1.bf16.msra.mxu0 0
    %1279 = vmatprep.subr.bf16.mxu0 0
    %1280 = vmatpush1.bf16.msra.mxu0 0
    %1281 = vmatprep.subr.bf16.mxu0 0
    %1282 = vmatpush1.bf16.msra.mxu0 %v1265
    %1283 = vmatprep.subr.bf16.mxu0 0
    %1284 = vmatpush2.bf16.msra.mxu0 0
    %1285 = vmatprep.subr.bf16.mxu0 0
    %1286 = vmatpush2.bf16.msra.mxu0 0
    %1287 = vmatprep.subr.bf16.mxu0 0
    %1288 = vmatpush2.bf16.msra.mxu0 0
    %1289 = vmatprep.subr.bf16.mxu0 0
    %1290 = vmatpush2.bf16.msra.mxu0 0
    %1291 = vmatprep.subr.bf16.mxu0 0
    %1292 = vmatpush2.bf16.msra.mxu0 0
    %1293 = vmatprep.subr.bf16.mxu0 0
    %1294 = vmatpush2.bf16.msra.mxu0 0
    %1295 = vmatprep.subr.bf16.mxu0 0
    %1296 = vmatpush2.bf16.msra.mxu0 0
    %1297 = vmatprep.subr.bf16.mxu0 0
    %1298 = vmatpush2.bf16.msra.mxu0 0
    %1299 = vmatprep.mubr.bf16.mxu0 0
    %1300 = vmatmul.mubr.bf16.gmra.mxu0 %v1262
    %v1301 = vpop.f32.mrf.mxu0
    %v1302 = vadd.f32 0.0, %v1301
    %v1303 = vpop.f32.mrf.mxu0
    %v1304 = vpop.f32.mrf.mxu0
    %v1305 = vpop.f32.mrf.mxu0
    %1306 = vdwg.mxu0
    %1308 = vrot.lane.b32.xlu0 %v1302, 16
    %v1309 = vpop.permute.xlu0 %1308
    %v1311 = vsel %vm253, %v1192, %v1309
    %v1312 = vpack.c.bf16 %v1084, %v1084
    %1314 = vrot.lane.b32.xlu0 %v1312, 96
    %v1315 = vpop.permute.xlu0 %1314
    %v1317 = vsel %vm253, %v1312, 0
    %v1320 = vsel %vm253, %v1315, 0
    %1322 = vmatprep.subr.bf16.mxu0 0
    %1323 = vmatpush1.bf16.xpose.msra.mxu0 0
    %1324 = vmatprep.subr.bf16.mxu0 0
    %1325 = vmatpush1.bf16.xpose.msra.mxu0 0
    %1326 = vmatprep.subr.bf16.mxu0 0
    %1327 = vmatpush1.bf16.xpose.msra.mxu0 0
    %1328 = vmatprep.subr.bf16.mxu0 0
    %1329 = vmatpush1.bf16.xpose.msra.mxu0 0
    %1330 = vmatprep.subr.bf16.mxu0 0
    %1331 = vmatpush1.bf16.xpose.msra.mxu0 0
    %1332 = vmatprep.subr.bf16.mxu0 0
    %1333 = vmatpush1.bf16.xpose.msra.mxu0 0
    %1334 = vmatprep.subr.bf16.mxu0 0
    %1335 = vmatpush1.bf16.xpose.msra.mxu0 0
    %1336 = vmatprep.subr.bf16.mxu0 0
    %1337 = vmatpush1.bf16.xpose.msra.mxu0 %v1320
    %1338 = vmatprep.subr.bf16.mxu0 0
    %1339 = vmatpush2.bf16.xpose.msra.mxu0 0
    %1340 = vmatprep.subr.bf16.mxu0 0
    %1341 = vmatpush2.bf16.xpose.msra.mxu0 0
    %1342 = vmatprep.subr.bf16.mxu0 0
    %1343 = vmatpush2.bf16.xpose.msra.mxu0 0
    %1344 = vmatprep.subr.bf16.mxu0 0
    %1345 = vmatpush2.bf16.xpose.msra.mxu0 0
    %1346 = vmatprep.subr.bf16.mxu0 0
    %1347 = vmatpush2.bf16.xpose.msra.mxu0 0
    %1348 = vmatprep.subr.bf16.mxu0 0
    %1349 = vmatpush2.bf16.xpose.msra.mxu0 0
    %1350 = vmatprep.subr.bf16.mxu0 0
    %1351 = vmatpush2.bf16.xpose.msra.mxu0 0
    %1352 = vmatprep.subr.bf16.mxu0 0
    %1353 = vmatpush2.bf16.xpose.msra.mxu0 0
    %1354 = vmatprep.mubr.bf16.mxu0 0
    %1355 = vmatmul.mubr.bf16.gmra.mxu0 %v1317
    %v1356 = vpop.f32.mrf.mxu0
    %v1357 = vadd.f32 0.0, %v1356
    %v1358 = vpop.f32.mrf.mxu0
    %v1359 = vpop.f32.mrf.mxu0
    %v1360 = vpop.f32.mrf.mxu0
    %1361 = vdwg.mxu0
    %v1362 = vsel %vm300, %v1357, -inf
    %1363 = vmax.xlane.f32.xlu0 %v1362
    %v1364 = vpop.xlane.xlu0 %1363
    %v1365 = vsub.f32 %v1357, %v1364
    %v1366 = vmul.f32 %v1365, 1.442695
    %v1367 = vpow.pop %v1366
    %v1368 = vsel %vm300, %v1367, 0.0
    %1369 = vadd.xlane.f32.xlu0 %v1368
    %v1370 = vpop.xlane.xlu0 %1369
    %v1371 = vrcp.pop %v1370
    %v1372 = vmul.f32 %v1367, %v1371
    %v1373 = vpack.c.bf16 %v1372, %v1372
    %1374 = vrot.lane.b32.xlu0 %v1312, 64
    %v1375 = vpop.permute.xlu0 %1374
    %v1377 = vsel %vm300, %v1373, 0
    %v1380 = vsel %vm318, %v1375, 0
    %1382 = vmatprep.subr.bf16.mxu0 0
    %1383 = vmatpush1.bf16.msra.mxu0 0
    %1384 = vmatprep.subr.bf16.mxu0 0
    %1385 = vmatpush1.bf16.msra.mxu0 0
    %1386 = vmatprep.subr.bf16.mxu0 0
    %1387 = vmatpush1.bf16.msra.mxu0 0
    %1388 = vmatprep.subr.bf16.mxu0 0
    %1389 = vmatpush1.bf16.msra.mxu0 0
    %1390 = vmatprep.subr.bf16.mxu0 0
    %1391 = vmatpush1.bf16.msra.mxu0 0
    %1392 = vmatprep.subr.bf16.mxu0 0
    %1393 = vmatpush1.bf16.msra.mxu0 0
    %1394 = vmatprep.subr.bf16.mxu0 0
    %1395 = vmatpush1.bf16.msra.mxu0 0
    %1396 = vmatprep.subr.bf16.mxu0 0
    %1397 = vmatpush1.bf16.msra.mxu0 %v1380
    %1398 = vmatprep.subr.bf16.mxu0 0
    %1399 = vmatpush2.bf16.msra.mxu0 0
    %1400 = vmatprep.subr.bf16.mxu0 0
    %1401 = vmatpush2.bf16.msra.mxu0 0
    %1402 = vmatprep.subr.bf16.mxu0 0
    %1403 = vmatpush2.bf16.msra.mxu0 0
    %1404 = vmatprep.subr.bf16.mxu0 0
    %1405 = vmatpush2.bf16.msra.mxu0 0
    %1406 = vmatprep.subr.bf16.mxu0 0
    %1407 = vmatpush2.bf16.msra.mxu0 0
    %1408 = vmatprep.subr.bf16.mxu0 0
    %1409 = vmatpush2.bf16.msra.mxu0 0
    %1410 = vmatprep.subr.bf16.mxu0 0
    %1411 = vmatpush2.bf16.msra.mxu0 0
    %1412 = vmatprep.subr.bf16.mxu0 0
    %1413 = vmatpush2.bf16.msra.mxu0 0
    %1414 = vmatprep.mubr.bf16.mxu0 0
    %1415 = vmatmul.mubr.bf16.gmra.mxu0 %v1377
    %v1416 = vpop.f32.mrf.mxu0
    %v1417 = vadd.f32 0.0, %v1416
    %v1418 = vpop.f32.mrf.mxu0
    %v1419 = vpop.f32.mrf.mxu0
    %v1420 = vpop.f32.mrf.mxu0
    %1421 = vdwg.mxu0
    %1422 = vrot.lane.b32.xlu0 %v1312, 112
    %v1423 = vpop.permute.xlu0 %1422
    %1424 = vrot.lane.b32.xlu0 %v1312, 80
    %v1425 = vpop.permute.xlu0 %1424
    %v1427 = vsel %vm253, %v1423, 0
    %v1430 = vsel %vm253, %v1425, 0
    %1432 = vmatprep.subr.bf16.mxu0 0
    %1433 = vmatpush1.bf16.xpose.msra.mxu0 0
    %1434 = vmatprep.subr.bf16.mxu0 0
    %1435 = vmatpush1.bf16.xpose.msra.mxu0 0
    %1436 = vmatprep.subr.bf16.mxu0 0
    %1437 = vmatpush1.bf16.xpose.msra.mxu0 0
    %1438 = vmatprep.subr.bf16.mxu0 0
    %1439 = vmatpush1.bf16.xpose.msra.mxu0 0
    %1440 = vmatprep.subr.bf16.mxu0 0
    %1441 = vmatpush1.bf16.xpose.msra.mxu0 0
    %1442 = vmatprep.subr.bf16.mxu0 0
    %1443 = vmatpush1.bf16.xpose.msra.mxu0 0
    %1444 = vmatprep.subr.bf16.mxu0 0
    %1445 = vmatpush1.bf16.xpose.msra.mxu0 0
    %1446 = vmatprep.subr.bf16.mxu0 0
    %1447 = vmatpush1.bf16.xpose.msra.mxu0 %v1430
    %1448 = vmatprep.subr.bf16.mxu0 0
    %1449 = vmatpush2.bf16.xpose.msra.mxu0 0
    %1450 = vmatprep.subr.bf16.mxu0 0
    %1451 = vmatpush2.bf16.xpose.msra.mxu0 0
    %1452 = vmatprep.subr.bf16.mxu0 0
    %1453 = vmatpush2.bf16.xpose.msra.mxu0 0
    %1454 = vmatprep.subr.bf16.mxu0 0
    %1455 = vmatpush2.bf16.xpose.msra.mxu0 0
    %1456 = vmatprep.subr.bf16.mxu0 0
    %1457 = vmatpush2.bf16.xpose.msra.mxu0 0
    %1458 = vmatprep.subr.bf16.mxu0 0
    %1459 = vmatpush2.bf16.xpose.msra.mxu0 0
    %1460 = vmatprep.subr.bf16.mxu0 0
    %1461 = vmatpush2.bf16.xpose.msra.mxu0 0
    %1462 = vmatprep.subr.bf16.mxu0 0
    %1463 = vmatpush2.bf16.xpose.msra.mxu0 0
    %1464 = vmatprep.mubr.bf16.mxu0 0
    %1465 = vmatmul.mubr.bf16.gmra.mxu0 %v1427
    %v1466 = vpop.f32.mrf.mxu0
    %v1467 = vadd.f32 0.0, %v1466
    %v1468 = vpop.f32.mrf.mxu0
    %v1469 = vpop.f32.mrf.mxu0
    %v1470 = vpop.f32.mrf.mxu0
    %1471 = vdwg.mxu0
    %v1472 = vsel %vm300, %v1467, -inf
    %1473 = vmax.xlane.f32.xlu0 %v1472
    %v1474 = vpop.xlane.xlu0 %1473
    %v1475 = vsub.f32 %v1467, %v1474
    %v1476 = vmul.f32 %v1475, 1.442695
    %v1477 = vpow.pop %v1476
    %v1478 = vsel %vm300, %v1477, 0.0
    %1479 = vadd.xlane.f32.xlu0 %v1478
    %v1480 = vpop.xlane.xlu0 %1479
    %v1481 = vrcp.pop %v1480
    %v1482 = vmul.f32 %v1477, %v1481
    %v1483 = vpack.c.bf16 %v1482, %v1482
    %1484 = vrot.lane.b32.xlu0 %v1312, 48
    %v1485 = vpop.permute.xlu0 %1484
    %v1487 = vsel %vm300, %v1483, 0
    %v1490 = vsel %vm318, %v1485, 0
    %1492 = vmatprep.subr.bf16.mxu0 0
    %1493 = vmatpush1.bf16.msra.mxu0 0
    %1494 = vmatprep.subr.bf16.mxu0 0
    %1495 = vmatpush1.bf16.msra.mxu0 0
    %1496 = vmatprep.subr.bf16.mxu0 0
    %1497 = vmatpush1.bf16.msra.mxu0 0
    %1498 = vmatprep.subr.bf16.mxu0 0
    %1499 = vmatpush1.bf16.msra.mxu0 0
    %1500 = vmatprep.subr.bf16.mxu0 0
    %1501 = vmatpush1.bf16.msra.mxu0 0
    %1502 = vmatprep.subr.bf16.mxu0 0
    %1503 = vmatpush1.bf16.msra.mxu0 0
    %1504 = vmatprep.subr.bf16.mxu0 0
    %1505 = vmatpush1.bf16.msra.mxu0 0
    %1506 = vmatprep.subr.bf16.mxu0 0
    %1507 = vmatpush1.bf16.msra.mxu0 %v1490
    %1508 = vmatprep.subr.bf16.mxu0 0
    %1509 = vmatpush2.bf16.msra.mxu0 0
    %1510 = vmatprep.subr.bf16.mxu0 0
    %1511 = vmatpush2.bf16.msra.mxu0 0
    %1512 = vmatprep.subr.bf16.mxu0 0
    %1513 = vmatpush2.bf16.msra.mxu0 0
    %1514 = vmatprep.subr.bf16.mxu0 0
    %1515 = vmatpush2.bf16.msra.mxu0 0
    %1516 = vmatprep.subr.bf16.mxu0 0
    %1517 = vmatpush2.bf16.msra.mxu0 0
    %1518 = vmatprep.subr.bf16.mxu0 0
    %1519 = vmatpush2.bf16.msra.mxu0 0
    %1520 = vmatprep.subr.bf16.mxu0 0
    %1521 = vmatpush2.bf16.msra.mxu0 0
    %1522 = vmatprep.subr.bf16.mxu0 0
    %1523 = vmatpush2.bf16.msra.mxu0 0
    %1524 = vmatprep.mubr.bf16.mxu0 0
    %1525 = vmatmul.mubr.bf16.gmra.mxu0 %v1487
    %v1526 = vpop.f32.mrf.mxu0
    %v1527 = vadd.f32 0.0, %v1526
    %v1528 = vpop.f32.mrf.mxu0
    %v1529 = vpop.f32.mrf.mxu0
    %v1530 = vpop.f32.mrf.mxu0
    %1531 = vdwg.mxu0
    %1533 = vrot.lane.b32.xlu0 %v1527, 16
    %v1534 = vpop.permute.xlu0 %1533
    %v1536 = vsel %vm253, %v1417, %v1534
    %v1537 = vpack.c.bf16 %v1536, %v1311
    %s1538 = scalar_lea.vmem [#allocation8], 16
    %v1539 = vld [vmem:[%s1538] sm:$0xf]
    %v1540 = vld [vmem:[%s1538 + $0x4] sm:$0xf]
    %v1541 = vld [vmem:[%s1538 + $0x8] sm:$0xf]
    %v1542 = vld [vmem:[%s1538 + $0xc] sm:$0xf]
    %v1547 = vunpack.c.l.b16 %v1539
    %v1548 = vunpack.c.l.b16 %v1540
    %v1549 = vunpack.c.l.b16 %v1541
    %v1550 = vunpack.c.l.b16 %v1542
    %v1551 = vpack.c.b16 %v1548, %v1547
    %v1552 = vpack.c.b16 %v1550, %v1549
    %v1556 = vsel %vm204, %v1537, 0
    %1558 = vmatprep.subr.bf16.mxu0 0
    %1559 = vmatpush1.bf16.msra.mxu0 0
    %1560 = vmatprep.subr.bf16.mxu0 0
    %1561 = vmatpush1.bf16.msra.mxu0 0
    %1562 = vmatprep.subr.bf16.mxu0 0
    %1563 = vmatpush1.bf16.msra.mxu0 0
    %1564 = vmatprep.subr.bf16.mxu0 0
    %1565 = vmatpush1.bf16.msra.mxu0 0
    %1566 = vmatprep.subr.bf16.mxu0 0
    %1567 = vmatpush1.bf16.msra.mxu0 0
    %1568 = vmatprep.subr.bf16.mxu0 0
    %1569 = vmatpush1.bf16.msra.mxu0 0
    %1570 = vmatprep.subr.bf16.mxu0 0
    %1571 = vmatpush1.bf16.msra.mxu0 %v1552
    %1572 = vmatprep.subr.bf16.mxu0 0
    %1573 = vmatpush1.bf16.msra.mxu0 %v1551
    %1574 = vmatprep.subr.bf16.mxu0 0
    %1575 = vmatpush2.bf16.msra.mxu0 0
    %1576 = vmatprep.subr.bf16.mxu0 0
    %1577 = vmatpush2.bf16.msra.mxu0 0
    %1578 = vmatprep.subr.bf16.mxu0 0
    %1579 = vmatpush2.bf16.msra.mxu0 0
    %1580 = vmatprep.subr.bf16.mxu0 0
    %1581 = vmatpush2.bf16.msra.mxu0 0
    %1582 = vmatprep.subr.bf16.mxu0 0
    %1583 = vmatpush2.bf16.msra.mxu0 0
    %1584 = vmatprep.subr.bf16.mxu0 0
    %1585 = vmatpush2.bf16.msra.mxu0 0
    %1586 = vmatprep.subr.bf16.mxu0 0
    %1587 = vmatpush2.bf16.msra.mxu0 0
    %1588 = vmatprep.subr.bf16.mxu0 0
    %1589 = vmatpush2.bf16.msra.mxu0 0
    %1590 = vmatprep.mubr.bf16.mxu0 0
    %1591 = vmatmul.mubr.bf16.gmra.mxu0 %v1556
    %v1592 = vpop.f32.mrf.mxu0
    %v1593 = vadd.f32 0.0, %v1592
    %v1594 = vpop.f32.mrf.mxu0
    %v1595 = vpop.f32.mrf.mxu0
    %v1596 = vadd.f32 0.0, %v1595
    %v1597 = vpop.f32.mrf.mxu0
    %1598 = vdwg.mxu0
    %v1599 = vadd.f32 %v969, %v1593
    %v1600 = vadd.f32 %v970, %v1596
    %s1601 = scalar_lea.vmem %s6, 1
    %v1602 = vld [vmem:[%s1601] sm:$0x1]
    %v1604 = vlaneseq
    %v1605 = vshrl.u32 %v1604, 7
    %v1606 = vsub.s32 0, %v1605
    %v1607 = vrot.slane %v1602, %v1606
    %v1609 = vadd.f32 %v1599, %v1607
    %v1610 = vadd.f32 %v1600, %v1607
    %s1611 = scalar_lea.vmem %s7, 1
    %v1612 = vld [vmem:[%s1611] sm:$0x1]
    %s1613 = scalar_lea.vmem %s8, 1
    %v1614 = vld [vmem:[%s1613] sm:$0x1]
    %v1615 = vsel %vm204, %v1609, 0.0
    %1616 = vadd.xlane.f32.xlu0 %v1615
    %v1617 = vpop.xlane.xlu0 %1616
    %v1618 = vsel %vm204, %v1610, 0.0
    %1619 = vadd.xlane.f32.xlu0 %v1618
    %v1620 = vpop.xlane.xlu0 %1619
    %v1621 = vmul.f32 %v1617, %v782
    %v1622 = vmul.f32 %v1620, %v782
    %v1623 = vsub.f32 %v1609, %v1621
    %v1624 = vsub.f32 %v1610, %v1622
    %v1625 = vmul.f32 %v1623, %v1623
    %v1626 = vmul.f32 %v1624, %v1624
    %v1627 = vsel %vm204, %v1625, 0.0
    %1628 = vadd.xlane.f32.xlu0 %v1627
    %v1629 = vpop.xlane.xlu0 %1628
    %v1630 = vsel %vm204, %v1626, 0.0
    %1631 = vadd.xlane.f32.xlu0 %v1630
    %v1632 = vpop.xlane.xlu0 %1631
    %v1633 = vmul.f32 %v1629, %v782
    %v1634 = vmul.f32 %v1632, %v782
    %v1635 = vadd.f32 %v1633, 1e-05
    %v1636 = vadd.f32 %v1634, 1e-05
    %v1637 = vrsqrt.pop %v1635
    %v1638 = vrsqrt.pop %v1636
    %v1639 = vmul.f32 %v1623, %v1637
    %v1640 = vmul.f32 %v1624, %v1638
    %v1642 = vlaneseq
    %v1643 = vshrl.u32 %v1642, 7
    %v1644 = vsub.s32 0, %v1643
    %v1645 = vrot.slane %v1612, %v1644
    %v1647 = vmul.f32 %v1639, %v1645
    %v1648 = vmul.f32 %v1640, %v1645
    %v1650 = vlaneseq
    %v1651 = vshrl.u32 %v1650, 7
    %v1652 = vsub.s32 0, %v1651
    %v1653 = vrot.slane %v1614, %v1652
    %v1655 = vadd.f32 %v1647, %v1653
    %v1656 = vadd.f32 %v1648, %v1653
    %v1657 = vpack.c.bf16 %v1656, %v1655
    %s1658 = scalar_lea.vmem [#allocation10], 16
    %v1659 = vld [vmem:[%s1658] sm:$0xf]
    %v1660 = vld [vmem:[%s1658 + $0x4] sm:$0xf]
    %v1661 = vld [vmem:[%s1658 + $0x8] sm:$0xf]
    %v1662 = vld [vmem:[%s1658 + $0xc] sm:$0xf]
    %s1663 = scalar_lea.vmem [#allocation11], 1
    %v1664 = vld [vmem:[%s1663] sm:$0x1]
    %v1666 = vlaneseq
    %v1667 = vshrl.u32 %v1666, 7
    %v1668 = vsub.s32 0, %v1667
    %v1669 = vrot.slane %v1664, %v1668
    %v1675 = vunpack.c.l.b16 %v1659
    %v1676 = vunpack.c.l.b16 %v1660
    %v1677 = vunpack.c.l.b16 %v1661
    %v1678 = vunpack.c.l.b16 %v1662
    %v1679 = vpack.c.b16 %v1676, %v1675
    %v1680 = vpack.c.b16 %v1678, %v1677
    %v1684 = vsel %vm204, %v1657, 0
    %1686 = vmatprep.subr.bf16.mxu0 0
    %1687 = vmatpush1.bf16.msra.mxu0 0
    %1688 = vmatprep.subr.bf16.mxu0 0
    %1689 = vmatpush1.bf16.msra.mxu0 0
    %1690 = vmatprep.subr.bf16.mxu0 0
    %1691 = vmatpush1.bf16.msra.mxu0 0
    %1692 = vmatprep.subr.bf16.mxu0 0
    %1693 = vmatpush1.bf16.msra.mxu0 0
    %1694 = vmatprep.subr.bf16.mxu0 0
    %1695 = vmatpush1.bf16.msra.mxu0 0
    %1696 = vmatprep.subr.bf16.mxu0 0
    %1697 = vmatpush1.bf16.msra.mxu0 0
    %1698 = vmatprep.subr.bf16.mxu0 0
    %1699 = vmatpush1.bf16.msra.mxu0 %v1680
    %1700 = vmatprep.subr.bf16.mxu0 0
    %1701 = vmatpush1.bf16.msra.mxu0 %v1679
    %1702 = vmatprep.subr.bf16.mxu0 0
    %1703 = vmatpush2.bf16.msra.mxu0 0
    %1704 = vmatprep.subr.bf16.mxu0 0
    %1705 = vmatpush2.bf16.msra.mxu0 0
    %1706 = vmatprep.subr.bf16.mxu0 0
    %1707 = vmatpush2.bf16.msra.mxu0 0
    %1708 = vmatprep.subr.bf16.mxu0 0
    %1709 = vmatpush2.bf16.msra.mxu0 0
    %1710 = vmatprep.subr.bf16.mxu0 0
    %1711 = vmatpush2.bf16.msra.mxu0 0
    %1712 = vmatprep.subr.bf16.mxu0 0
    %1713 = vmatpush2.bf16.msra.mxu0 0
    %1714 = vmatprep.subr.bf16.mxu0 0
    %1715 = vmatpush2.bf16.msra.mxu0 0
    %1716 = vmatprep.subr.bf16.mxu0 0
    %1717 = vmatpush2.bf16.msra.mxu0 0
    %1718 = vmatprep.mubr.bf16.mxu0 0
    %1719 = vmatmul.mubr.bf16.gmra.mxu0 %v1684
    %v1720 = vpop.f32.mrf.mxu0
    %v1721 = vadd.f32 %v1669, %v1720
    %v1722 = vpop.f32.mrf.mxu0
    %v1723 = vpop.f32.mrf.mxu0
    %v1724 = vadd.f32 %v1669, %v1723
    %v1725 = vpop.f32.mrf.mxu0
    %1726 = vdwg.mxu0
    %v1727 = vmax.f32 %v1721, 0.0
    %v1728 = vmax.f32 %v1724, 0.0
    %1731 = vrot.lane.b32.xlu0 %v1727, 96
    %v1732 = vpop.permute.xlu0 %1731
    %1733 = vrot.lane.b32.xlu0 %v1728, 96
    %v1734 = vpop.permute.xlu0 %1733
    %v1737 = vmul.f32 %v1721, %v1732
    %v1738 = vmul.f32 %v1724, %v1734
    %v1739 = vpack.c.bf16 %v1738, %v1737
    %s1740 = scalar_lea.vmem [#allocation13], 16
    %v1741 = vld [vmem:[%s1740] sm:$0xf]
    %v1742 = vld [vmem:[%s1740 + $0x4] sm:$0xf]
    %v1743 = vld [vmem:[%s1740 + $0x8] sm:$0xf]
    %v1744 = vld [vmem:[%s1740 + $0xc] sm:$0xf]
    %v1749 = vunpack.c.l.b16 %v1741
    %v1750 = vunpack.c.l.b16 %v1742
    %v1751 = vunpack.c.l.b16 %v1743
    %v1752 = vunpack.c.l.b16 %v1744
    %v1753 = vpack.c.b16 %v1750, %v1749
    %v1754 = vpack.c.b16 %v1752, %v1751
    %v1758 = vsel %vm204, %v1739, 0
    %1760 = vmatprep.subr.bf16.mxu0 0
    %1761 = vmatpush1.bf16.msra.mxu0 0
    %1762 = vmatprep.subr.bf16.mxu0 0
    %1763 = vmatpush1.bf16.msra.mxu0 0
    %1764 = vmatprep.subr.bf16.mxu0 0
    %1765 = vmatpush1.bf16.msra.mxu0 0
    %1766 = vmatprep.subr.bf16.mxu0 0
    %1767 = vmatpush1.bf16.msra.mxu0 0
    %1768 = vmatprep.subr.bf16.mxu0 0
    %1769 = vmatpush1.bf16.msra.mxu0 0
    %1770 = vmatprep.subr.bf16.mxu0 0
    %1771 = vmatpush1.bf16.msra.mxu0 0
    %1772 = vmatprep.subr.bf16.mxu0 0
    %1773 = vmatpush1.bf16.msra.mxu0 %v1754
    %1774 = vmatprep.subr.bf16.mxu0 0
    %1775 = vmatpush1.bf16.msra.mxu0 %v1753
    %1776 = vmatprep.subr.bf16.mxu0 0
    %1777 = vmatpush2.bf16.msra.mxu0 0
    %1778 = vmatprep.subr.bf16.mxu0 0
    %1779 = vmatpush2.bf16.msra.mxu0 0
    %1780 = vmatprep.subr.bf16.mxu0 0
    %1781 = vmatpush2.bf16.msra.mxu0 0
    %1782 = vmatprep.subr.bf16.mxu0 0
    %1783 = vmatpush2.bf16.msra.mxu0 0
    %1784 = vmatprep.subr.bf16.mxu0 0
    %1785 = vmatpush2.bf16.msra.mxu0 0
    %1786 = vmatprep.subr.bf16.mxu0 0
    %1787 = vmatpush2.bf16.msra.mxu0 0
    %1788 = vmatprep.subr.bf16.mxu0 0
    %1789 = vmatpush2.bf16.msra.mxu0 0
    %1790 = vmatprep.subr.bf16.mxu0 0
    %1791 = vmatpush2.bf16.msra.mxu0 0
    %1792 = vmatprep.mubr.bf16.mxu0 0
    %1793 = vmatmul.mubr.bf16.gmra.mxu0 %v1758
    %v1794 = vpop.f32.mrf.mxu0
    %v1795 = vadd.f32 0.0, %v1794
    %v1796 = vpop.f32.mrf.mxu0
    %v1797 = vpop.f32.mrf.mxu0
    %v1798 = vadd.f32 0.0, %v1797
    %v1799 = vpop.f32.mrf.mxu0
    %1800 = vdwg.mxu0
    %v1801 = vadd.f32 %v1609, %v1795
    %v1802 = vadd.f32 %v1610, %v1798
    %s1803 = scalar_lea.vmem [#allocation14], 1
    %v1804 = vld [vmem:[%s1803] sm:$0x1]
    %v1806 = vlaneseq
    %v1807 = vshrl.u32 %v1806, 7
    %v1808 = vsub.s32 0, %v1807
    %v1809 = vrot.slane %v1804, %v1808
    %v1811 = vadd.f32 %v1801, %v1809
    %v1812 = vadd.f32 %v1802, %v1809
    %v1813 = vld [vmem:[%s13] sm:$0x1]
    %v1814 = vld [vmem:[#allocation16] sm:$0x1]
    %v1815 = vsel %vm204, %v1811, 0.0
    %1816 = vadd.xlane.f32.xlu0 %v1815
    %v1817 = vpop.xlane.xlu0 %1816
    %v1818 = vsel %vm204, %v1812, 0.0
    %1819 = vadd.xlane.f32.xlu0 %v1818
    %v1820 = vpop.xlane.xlu0 %1819
    %v1821 = vmul.f32 %v1817, %v782
    %v1822 = vmul.f32 %v1820, %v782
    %v1823 = vsub.f32 %v1811, %v1821
    %v1824 = vsub.f32 %v1812, %v1822
    %v1825 = vmul.f32 %v1823, %v1823
    %v1826 = vmul.f32 %v1824, %v1824
    %v1827 = vsel %vm204, %v1825, 0.0
    %1828 = vadd.xlane.f32.xlu0 %v1827
    %v1829 = vpop.xlane.xlu0 %1828
    %v1830 = vsel %vm204, %v1826, 0.0
    %1831 = vadd.xlane.f32.xlu0 %v1830
    %v1832 = vpop.xlane.xlu0 %1831
    %v1833 = vmul.f32 %v1829, %v782
    %v1834 = vmul.f32 %v1832, %v782
    %v1835 = vadd.f32 %v1833, 1e-05
    %v1836 = vadd.f32 %v1834, 1e-05
    %v1837 = vrsqrt.pop %v1835
    %v1838 = vrsqrt.pop %v1836
    %v1839 = vmul.f32 %v1823, %v1837
    %v1840 = vmul.f32 %v1824, %v1838
    %v1842 = vlaneseq
    %v1843 = vshrl.u32 %v1842, 7
    %v1844 = vsub.s32 0, %v1843
    %v1845 = vrot.slane %v1813, %v1844
    %v1847 = vmul.f32 %v1839, %v1845
    %v1848 = vmul.f32 %v1840, %v1845
    %v1850 = vlaneseq
    %v1851 = vshrl.u32 %v1850, 7
    %v1852 = vsub.s32 0, %v1851
    %v1853 = vrot.slane %v1814, %v1852
    %v1855 = vadd.f32 %v1847, %v1853
    %v1856 = vadd.f32 %v1848, %v1853
    %v1857 = vmax.f32 %v1855, 0.0
    %v1858 = vmax.f32 %v1856, 0.0
    %v1859 = vpack.c.bf16 %v1858, %v1857
    %v1860 = vld [vmem:[%s15] sm:$0xf]
    %v1861 = vld [vmem:[%s15 + $0x4] sm:$0xf]
    %v1862 = vld [vmem:[%s15 + $0x8] sm:$0xf]
    %v1863 = vld [vmem:[%s15 + $0xc] sm:$0xf]
    %v1864 = vld [vmem:[%s16] sm:$0x1]
    %v1866 = vlaneseq
    %v1867 = vshrl.u32 %v1866, 7
    %v1868 = vsub.s32 0, %v1867
    %v1869 = vrot.slane %v1864, %v1868
    %v1875 = vunpack.c.l.b16 %v1860
    %v1876 = vunpack.c.l.b16 %v1861
    %v1877 = vunpack.c.l.b16 %v1862
    %v1878 = vunpack.c.l.b16 %v1863
    %v1879 = vpack.c.b16 %v1876, %v1875
    %v1880 = vpack.c.b16 %v1878, %v1877
    %v1884 = vsel %vm204, %v1859, 0
    %1886 = vmatprep.subr.bf16.mxu0 0
    %1887 = vmatpush1.bf16.msra.mxu0 0
    %1888 = vmatprep.subr.bf16.mxu0 0
    %1889 = vmatpush1.bf16.msra.mxu0 0
    %1890 = vmatprep.subr.bf16.mxu0 0
    %1891 = vmatpush1.bf16.msra.mxu0 0
    %1892 = vmatprep.subr.bf16.mxu0 0
    %1893 = vmatpush1.bf16.msra.mxu0 0
    %1894 = vmatprep.subr.bf16.mxu0 0
    %1895 = vmatpush1.bf16.msra.mxu0 0
    %1896 = vmatprep.subr.bf16.mxu0 0
    %1897 = vmatpush1.bf16.msra.mxu0 0
    %1898 = vmatprep.subr.bf16.mxu0 0
    %1899 = vmatpush1.bf16.msra.mxu0 %v1880
    %1900 = vmatprep.subr.bf16.mxu0 0
    %1901 = vmatpush1.bf16.msra.mxu0 %v1879
    %1902 = vmatprep.subr.bf16.mxu0 0
    %1903 = vmatpush2.bf16.msra.mxu0 0
    %1904 = vmatprep.subr.bf16.mxu0 0
    %1905 = vmatpush2.bf16.msra.mxu0 0
    %1906 = vmatprep.subr.bf16.mxu0 0
    %1907 = vmatpush2.bf16.msra.mxu0 0
    %1908 = vmatprep.subr.bf16.mxu0 0
    %1909 = vmatpush2.bf16.msra.mxu0 0
    %1910 = vmatprep.subr.bf16.mxu0 0
    %1911 = vmatpush2.bf16.msra.mxu0 0
    %1912 = vmatprep.subr.bf16.mxu0 0
    %1913 = vmatpush2.bf16.msra.mxu0 0
    %1914 = vmatprep.subr.bf16.mxu0 0
    %1915 = vmatpush2.bf16.msra.mxu0 0
    %1916 = vmatprep.subr.bf16.mxu0 0
    %1917 = vmatpush2.bf16.msra.mxu0 0
    %1918 = vmatprep.mubr.bf16.mxu0 0
    %1919 = vmatmul.mubr.bf16.gmra.mxu0 %v1884
    %v1920 = vpop.f32.mrf.mxu0
    %v1921 = vadd.f32 %v1869, %v1920
    %v1922 = vpop.f32.mrf.mxu0
    %v1923 = vpop.f32.mrf.mxu0
    %v1924 = vadd.f32 %v1869, %v1923
    %v1925 = vpop.f32.mrf.mxu0
    %1926 = vdwg.mxu0
    %1927 = vst [vmem:[#allocation17] sm:$0xff] %v1921
    %1928 = vst [vmem:[#allocation17 + $0x8] sm:$0xff] %v1924
    // Predicated region
    $region106: #{tpu_custom_call.1} parent=1 // pred_check
      _
    $region107: #{tpu_custom_call.1} parent=1 // pred_check_branch
      %1930 = sbr.rel (0) target = $region109
    $region108: #{tpu_custom_call.1} parent=1 // pred_region
      %s1932 = ssub.s32 256, 256
      %1933 = vsyncadd [#allocation4], %s1932
      %s1934 = sshll.u32 [#allocation17], 4
      %s1935 = int_to_ptr.vmem [resolvable:$true] %s1934
      %1940 = dma.vmem_to_hbm [thread:$0]  %s1935, 256, %s17, [#allocation4], 128, 128, 8
    $region109: #{tpu_custom_call.1} parent=1 // pred_fallthru
      _
    // Predicated region
    $region110: #{tpu_custom_call.1} parent=1 // pred_check
      _
    $region111: #{tpu_custom_call.1} parent=1 // pred_check_branch
      %1942 = sbr.rel (0) target = $region113
    $region112: #{tpu_custom_call.1} parent=1 // pred_region
      %1943 = dma.done [#allocation4], 256
    $region113: #{tpu_custom_call.1} parent=1 // pred_fallthru
      _
    %1944 = vsyncpa [#allocation3], 1
    %1945 = vsyncpa [#allocation6], 1
    %1946 = vsyncpa [#allocation9], 1
    %1947 = vsyncpa [#allocation12], 1
    %1948 = vsyncpa [#allocation15], 1
    %1949 = vsyncpa [#allocation4], 1

</llo_original>
